<compile_context>
chip_gen: v7x
topology: tpu7x:2x2x1
jax: 0.10.0
libtpu: 0.0.40
codegen_flags: <defaults>
</compile_context>

<pallas_src>
import math

import numpy as np
import jax
import jax.numpy as jnp
from jax.experimental import pallas as pl
from jax.experimental.pallas import tpu as pltpu


# ---------------------------------------------------------------------------
# helpers
# ---------------------------------------------------------------------------
def _round_up(v, m):
    return -(-v // m) * m


def _full_spec(shape):
    nd = len(shape)
    return pl.BlockSpec(shape, lambda *_, _nd=nd: (0,) * _nd)


def _adaptive_pool_matrix(in_size, out_size):
    """P[j, i] = 1/bin_size if input index j falls in adaptive output bin i, else 0.
    Matches torch.nn.functional.adaptive_avg_pool bin boundaries."""
    P = np.zeros((in_size, out_size), np.float32)
    for i in range(out_size):
        start = (i * in_size) // out_size
        end = -(-((i + 1) * in_size) // out_size)  # ceil
        P[start:end, i] = 1.0 / float(end - start)
    return jnp.asarray(P)


def _nearest_idx(out_size, in_size):
    """torch F.interpolate(mode='nearest'): src = floor(dst * in / out)."""
    return jnp.asarray((np.arange(out_size) * in_size) // out_size, jnp.int32)


def _expand_matrices(H, W):
    """One-hot expansion matrices used to build hw[r, h*W+w] = h[r,h]*w[r,w]
    with two small, exact matmuls inside the mask kernel."""
    k = np.arange(H * W)
    E_h = (k[None, :] // W == np.arange(H)[:, None]).astype(np.float32)  # (H, HW)
    E_w = (k[None, :] % W == np.arange(W)[:, None]).astype(np.float32)   # (W, HW)
    return jnp.asarray(E_h), jnp.asarray(E_w)


def _vmem_limit_bytes():
    """Generous-but-safe scoped VMEM limit per TPU generation."""
    try:
        kind = jax.devices()[0].device_kind.lower()
    except Exception:
        kind = ""
    if "v7" in kind:
        return 56 * 1024 * 1024      # 64 MiB physical per TC on v7x
    if "v5" in kind or "v6" in kind:
        return 100 * 1024 * 1024     # 128 MiB physical VMEM
    return 56 * 1024 * 1024          # unknown chip: v7x-safe default


def _pick_row_tile(n_rows, padded_row_bytes, budget_bytes, min_steps=4):
    """Largest multiple-of-8 row tile that (a) fits the per-buffer VMEM budget and
    (b) still yields >= min_steps (preferably an even number of) grid steps."""
    by_vmem = budget_bytes // max(1, padded_row_bytes)
    if by_vmem >= n_rows and n_rows < 8 * min_steps:
        return n_rows                       # too small to bother pipelining
    by_steps = -(-n_rows // min_steps)      # ceil
    tile = min(n_rows, max(1, by_vmem), by_steps)
    tile = max(8, (tile // 8) * 8)
    tile = min(tile, n_rows)
    steps = -(-n_rows // tile)
    if steps > 1 and steps % 2:             # best effort: even step count (megacore)
        alt = (-(-n_rows // (steps + 1)) // 8) * 8
        if alt >= 8 and (-(-n_rows // alt)) % 2 == 0:
            tile = alt
    return tile


# ---------------------------------------------------------------------------
# kernel 1: both adaptive average pools from a single streaming read of x
# ---------------------------------------------------------------------------
def _pool_kernel(x_ref, pd_ref, q_ref, d_ref, h_ref):
    x = x_ref[...]                       # (tile, D, H*W)
    s_hw = jnp.sum(x, axis=2)            # (tile, D)    sum over H,W
    s_d = jnp.sum(x, axis=1)             # (tile, H*W)  sum over D
    # adaptive bins + 1/(HW) resp. 1/(DH) are folded into pd / q
    d_ref[...] = jnp.dot(s_hw, pd_ref[...], preferred_element_type=jnp.float32)
    h_ref[...] = jnp.dot(s_d, q_ref[...], preferred_element_type=jnp.float32)


def _adaptive_pools(x3, P_d, Q_hw, tile, vmem_limit_bytes):
    BC, D, HW = x3.shape
    M = P_d.shape[1]
    grid = (pl.cdiv(BC, tile),)
    return pl.pallas_call(
        _pool_kernel,
        out_shape=(jax.ShapeDtypeStruct((BC, M), jnp.float32),
                   jax.ShapeDtypeStruct((BC, M), jnp.float32)),
        grid=grid,
        in_specs=[pl.BlockSpec((tile, D, HW), lambda i: (i, 0, 0)),
                  pl.BlockSpec((D, M), lambda i: (0, 0)),
                  pl.BlockSpec((HW, M), lambda i: (0, 0))],
        out_specs=(pl.BlockSpec((tile, M), lambda i: (i, 0)),
                   pl.BlockSpec((tile, M), lambda i: (i, 0))),
        compiler_params=pltpu.CompilerParams(
            dimension_semantics=("parallel",),
            vmem_limit_bytes=vmem_limit_bytes),
    )(x3, P_d, Q_hw)


# ---------------------------------------------------------------------------
# kernel 2: depthwise-conv combine + BN + ReLU + SE reduce/project + sigmoid
#           single block; rows = b*M + m, lanes = 3C (lane-dense channel dim)
# ---------------------------------------------------------------------------
def _se_kernel(x_ref, xp_ref, xn_ref, w0_ref, w1_ref, w2_ref,
               bns_ref, bnb_ref, sewt_ref, seb_ref, prwt_ref, prb_ref, out_ref):
    # depthwise conv1d (k=3, same zero padding): shifted copies come in as inputs
    y = (w0_ref[...] * xp_ref[...]
         + w1_ref[...] * x_ref[...]
         + w2_ref[...] * xn_ref[...])                                   # (B*M, 3C)
    # folded BatchNorm1d (inference) + ReLU
    y = jnp.maximum(y * bns_ref[...] + bnb_ref[...], 0.0)
    # SE reduce (1x1 conv) + ReLU
    z = jnp.dot(y, sewt_ref[...], preferred_element_type=jnp.float32) + seb_ref[...]
    z = jnp.maximum(z, 0.0)
    # project (1x1 conv) + sigmoid
    p = jnp.dot(z, prwt_ref[...], preferred_element_type=jnp.float32) + prb_ref[...]
    out_ref[...] = jax.nn.sigmoid(p)


def _se_gate(x2, xp2, xn2, params):
    BM, C3 = x2.shape
    S = params["sew"].shape[0]
    w0 = params["w0"].reshape(1, C3)
    w1 = params["w1"].reshape(1, C3)
    w2 = params["w2"].reshape(1, C3)
    bns = params["bns"].reshape(1, C3)
    bnb = params["bnb"].reshape(1, C3)
    sewt = params["sew"].T                       # (3C, S)
    seb = params["seb"].reshape(1, S)
    prwt = params["prw"].T                       # (S, 3C)
    prb = params["prb"].reshape(1, C3)
    return pl.pallas_call(
        _se_kernel,
        out_shape=jax.ShapeDtypeStruct((BM, C3), jnp.float32),
        in_specs=[_full_spec((BM, C3))] * 3
                 + [_full_spec((1, C3))] * 5
                 + [_full_spec((C3, S)), _full_spec((1, S)),
                    _full_spec((S, C3)), _full_spec((1, C3))],
        out_specs=_full_spec((BM, C3)),
    )(x2, xp2, xn2, w0, w1, w2, bns, bnb, sewt, seb, prwt, prb)


# ---------------------------------------------------------------------------
# kernel 3: broadcast mask multiply (the element-wise hot path)
# ---------------------------------------------------------------------------
def _mask_kernel(x_ref, d_ref, h_ref, w_ref, eh_ref, ew_ref, o_ref):
    # hw[r, h*W + w] = h_up[r, h] * w_up[r, w]; built with exact one-hot matmuls
    # on the otherwise idle MXU instead of streaming a (BC, H*W) tensor from HBM.
    hw = (jnp.dot(h_ref[...], eh_ref[...], preferred_element_type=jnp.float32)
          * jnp.dot(w_ref[...], ew_ref[...], preferred_element_type=jnp.float32))
    d = d_ref[...]                       # (tile, D)
    # progressive fuse: no standalone full-size mask tensor
    o_ref[...] = (x_ref[...] * d[:, :, None]) * hw[:, None, :]


def _apply_mask(x3, d_up, h_up, w_up, E_h, E_w, tile, vmem_limit_bytes):
    BC, D, HW = x3.shape
    H = E_h.shape[0]
    W = E_w.shape[0]
    grid = (pl.cdiv(BC, tile),)
    return pl.pallas_call(
        _mask_kernel,
        out_shape=jax.ShapeDtypeStruct((BC, D, HW), jnp.float32),
        grid=grid,
        in_specs=[pl.BlockSpec((tile, D, HW), lambda i: (i, 0, 0)),
                  pl.BlockSpec((tile, D), lambda i: (i, 0)),
                  pl.BlockSpec((tile, H), lambda i: (i, 0)),
                  pl.BlockSpec((tile, W), lambda i: (i, 0)),
                  pl.BlockSpec((H, HW), lambda i: (0, 0)),
                  pl.BlockSpec((W, HW), lambda i: (0, 0))],
        out_specs=pl.BlockSpec((tile, D, HW), lambda i: (i, 0, 0)),
        compiler_params=pltpu.CompilerParams(
            dimension_semantics=("parallel",),
            vmem_limit_bytes=vmem_limit_bytes),
    )(x3, d_up, h_up, w_up, E_h, E_w)


# ---------------------------------------------------------------------------
# full forward pass
# ---------------------------------------------------------------------------
def attention3d_forward(x, params, *, tile_bc=None, vmem_limit_bytes=None):
    x = x.astype(jnp.float32)
    B, C, D, H, W = x.shape
    M = min(D, H, W)
    BC, HW = B * C, H * W

    # lane-friendly view of x, reused by both big streaming kernels
    x3 = x.reshape(BC, D, HW)

    if vmem_limit_bytes is None:
        vmem_limit_bytes = _vmem_limit_bytes()
    # padded-aware block sizing: (tile, D, HW) f32 occupies
    # tile * roundup(D,8) * roundup(HW,128) * 4 bytes of VMEM (vreg layout).
    padded_row_bytes = _round_up(D, 8) * _round_up(HW, 128) * 4
    budget = vmem_limit_bytes // 5  # mask pass keeps ~4 big tiles live (dbl-buf in+out)
    if tile_bc is not None:
        tile = min(BC, int(tile_bc))
        if tile < BC and tile % 8:
            tile = max(8, (tile // 8) * 8)
    else:
        tile = _pick_row_tile(BC, padded_row_bytes, budget)

    # --- adaptive pooling branches (one streaming read of x) ----------------
    P_d = _adaptive_pool_matrix(D, M) / float(H * W)        # (D, M)
    P_w = _adaptive_pool_matrix(W, M) / float(D * H)        # (W, M)
    Q_hw = jnp.tile(P_w, (H, 1))                            # (H*W, M): row h*W+w -> P_w[w]
    d_pool, h_pool = _adaptive_pools(x3, P_d, Q_hw, tile, vmem_limit_bytes)
    d_bcm = d_pool.reshape(B, C, M)
    h_bcm = h_pool.reshape(B, C, M)
    # torch: transpose(3,4) keeps depth leading -> the "w" branch equals the "d" branch
    xcat = jnp.concatenate([d_bcm, h_bcm, d_bcm], axis=1)   # (B, 3C, M)

    # --- SE gate on (B*M, 3C) rows; +-1 shifts along M built in glue --------
    C3 = 3 * C
    xc_bm = jnp.transpose(xcat, (0, 2, 1))                  # (B, M, 3C)
    zero = jnp.zeros_like(xc_bm[:, :1, :])
    xp_bm = jnp.concatenate([zero, xc_bm[:, :-1, :]], axis=1)   # x[l-1], zero-padded
    xn_bm = jnp.concatenate([xc_bm[:, 1:, :], zero], axis=1)    # x[l+1], zero-padded
    gate2 = _se_gate(xc_bm.reshape(B * M, C3),
                     xp_bm.reshape(B * M, C3),
                     xn_bm.reshape(B * M, C3), params)       # (B*M, 3C)
    gate = jnp.transpose(gate2.reshape(B, M, C3), (0, 2, 1))  # (B, 3C, M)

    # --- per-axis nearest upsample (tiny, in glue); mask applied in-kernel --
    d_up = jnp.take(gate[:, :C, :], _nearest_idx(D, M), axis=2).reshape(BC, D)
    h_up = jnp.take(gate[:, C:2 * C, :], _nearest_idx(H, M), axis=2).reshape(BC, H)
    w_up = jnp.take(gate[:, 2 * C:, :], _nearest_idx(W, M), axis=2).reshape(BC, W)
    E_h, E_w = _expand_matrices(H, W)

    out3 = _apply_mask(x3, d_up, h_up, w_up, E_h, E_w, tile, vmem_limit_bytes)
    return out3.reshape(B, C, D, H, W)


# ---------------------------------------------------------------------------
# pure-JAX reference (mirrors the PyTorch forward), used for validation only
# ---------------------------------------------------------------------------
def _reference_forward(x, params):
    B, C, D, H, W = x.shape
    M = min(D, H, W)
    P_d = _adaptive_pool_matrix(D, M)
    P_w = _adaptive_pool_matrix(W, M)
    d_p = jnp.einsum("bcdhw,dm->bcm", x, P_d) / (H * W)
    h_p = jnp.einsum("bcdhw,wm->bcm", x, P_w) / (D * H)
    xc = jnp.concatenate([d_p, h_p, d_p], axis=1)            # (B, 3C, M)
    zero = jnp.zeros_like(xc[..., :1])
    xp = jnp.concatenate([zero, xc[..., :-1]], axis=-1)
    xn = jnp.concatenate([xc[..., 1:], zero], axis=-1)
    y = params["w0"][None] * xp + params["w1"][None] * xc + params["w2"][None] * xn
    y = jnp.maximum(y * params["bns"][None] + params["bnb"][None], 0.0)
    z = jnp.maximum(jnp.einsum("sc,bcm->bsm", params["sew"], y)
                    + params["seb"][None], 0.0)
    p = jnp.einsum("cs,bsm->bcm", params["prw"], z) + params["prb"][None]
    g = jax.nn.sigmoid(p)
    dg, hg, wg = g[:, :C], g[:, C:2 * C], g[:, 2 * C:]
    d_up = jnp.take(dg, _nearest_idx(D, M), axis=2)
    h_up = jnp.take(hg, _nearest_idx(H, M), axis=2)
    w_up = jnp.take(wg, _nearest_idx(W, M), axis=2)
    mask = (d_up[:, :, :, None, None] * h_up[:, :, None, :, None]
            * w_up[:, :, None, None, :])
    return x * mask


# ---------------------------------------------------------------------------
# deterministic parameter init (shapes from Attention3d.__init__)
# ---------------------------------------------------------------------------
def init_params(key, channels, kernel_size=3, bn_eps=1e-3, reduction=48):
    assert kernel_size == 3
    C3 = channels * 3
    S = max(1, C3 // reduction)
    ks = jax.random.split(key, 9)
    dw_w = jax.random.uniform(ks[0], (C3, kernel_size), jnp.float32,
                              minval=-1.0, maxval=1.0) / math.sqrt(kernel_size)
    gamma = 1.0 + 0.1 * jax.random.normal(ks[1], (C3,), jnp.float32)
    beta = 0.1 * jax.random.normal(ks[2], (C3,), jnp.float32)
    run_mean = 0.1 * jax.random.normal(ks[3], (C3,), jnp.float32)
    run_var = 1.0 + 0.1 * jax.random.uniform(ks[4], (C3,), jnp.float32)
    se_w = jax.random.normal(ks[5], (S, C3), jnp.float32) / math.sqrt(C3)
    se_b = 0.1 * jax.random.normal(ks[6], (S,), jnp.float32)
    pr_w = jax.random.normal(ks[7], (C3, S), jnp.float32) / math.sqrt(S)
    pr_b = 0.1 * jax.random.normal(ks[8], (C3,), jnp.float32)

    bn_scale = gamma / jnp.sqrt(run_var + bn_eps)
    bn_bias = beta - run_mean * bn_scale
    return dict(
        w0=dw_w[:, 0:1], w1=dw_w[:, 1:2], w2=dw_w[:, 2:3],
        bns=bn_scale[:, None], bnb=bn_bias[:, None],
        sew=se_w, seb=se_b[:, None],
        prw=pr_w, prb=pr_b[:, None],
    )


# ---------------------------------------------------------------------------
if __name__ == "__main__":
    # H*W = 128 keeps the (tile, D, H*W) blocks exactly lane-dense; B*C = 64
    # rows split into 4 pipelined "parallel" grid steps of 16 rows each.
    B, C, D, H, W = 2, 32, 8, 8, 16   # min_dim = 8; se_chann = max(1, 96 // 48) = 2
    key = jax.random.PRNGKey(0)
    kx, kp = jax.random.split(key)
    x = jax.random.normal(kx, (B, C, D, H, W), jnp.float32)
    params = init_params(kp, C)

    fwd = jax.jit(attention3d_forward)
    out = jax.block_until_ready(fwd(x, params))
    ref = jax.block_until_ready(_reference_forward(x, params))

    assert out.shape == (B, C, D, H, W)
    assert bool(jnp.all(jnp.isfinite(out)))
    err = float(jnp.max(jnp.abs(out - ref)))
    # 5e-4 tolerates per-generation MXU matmul-precision differences; real
    # indexing / pooling / shift bugs produce O(0.1) errors.
    assert err < 5e-4, f"max abs err vs reference: {err}"
    print("KERNEL_OK")
</pallas_src>

<mosaic_0001>
module attributes {stable_mosaic.version = 11 : i64} {
  func.func @_pool_kernel(%arg0: i32, %arg1: memref<16x8x128xf32, #tpu.memory_space<vmem>>, %arg2: memref<8x8xf32, #tpu.memory_space<vmem>>, %arg3: memref<128x8xf32, #tpu.memory_space<vmem>>, %arg4: memref<16x8xf32, #tpu.memory_space<vmem>>, %arg5: memref<16x8xf32, #tpu.memory_space<vmem>>) attributes {dimension_semantics = [#tpu.dimension_semantics<parallel>], iteration_bounds = array<i64: 4>, scalar_prefetch = 0 : i64, scratch_operands = 0 : i64, tpu.core_type = #tpu.core_type<tc>, window_params = [{transform_indices = @transform_0, window_bounds = array<i64: 16, 8, 128>}, {pipeline_mode = #tpu.pipeline_mode<synchronous>, transform_indices = @transform_1, window_bounds = array<i64: 8, 8>}, {pipeline_mode = #tpu.pipeline_mode<synchronous>, transform_indices = @transform_2, window_bounds = array<i64: 128, 8>}, {transform_indices = @transform_3, window_bounds = array<i64: 16, 8>}, {transform_indices = @transform_4, window_bounds = array<i64: 16, 8>}]} {
    %c0 = arith.constant 0 : index
    %c0_0 = arith.constant 0 : index
    %c0_1 = arith.constant 0 : index
    %0 = vector.load %arg1[%c0, %c0_0, %c0_1] : memref<16x8x128xf32, #tpu.memory_space<vmem>>, vector<16x8x128xf32>
    %cst = arith.constant dense<0.000000e+00> : vector<16x8xf32>
    %1 = vector.multi_reduction <add>, %0, %cst [2] : vector<16x8x128xf32> to vector<16x8xf32>
    %cst_2 = arith.constant dense<0.000000e+00> : vector<16x128xf32>
    %2 = vector.multi_reduction <add>, %0, %cst_2 [1] : vector<16x8x128xf32> to vector<16x128xf32>
    %c0_3 = arith.constant 0 : index
    %c0_4 = arith.constant 0 : index
    %3 = vector.load %arg2[%c0_3, %c0_4] : memref<8x8xf32, #tpu.memory_space<vmem>>, vector<8x8xf32>
    %cst_5 = arith.constant dense<0.000000e+00> : vector<16x8xf32>
    %4 = tpu.matmul %1, %3, %cst_5 {dimension_numbers = #tpu.dot_dimension_numbers<[1], [0], [0], [1], [0, 0, 1, 1], [], []>} : vector<16x8xf32>, vector<8x8xf32>, vector<16x8xf32> -> vector<16x8xf32>
    %c0_6 = arith.constant 0 : index
    %c0_7 = arith.constant 0 : index
    %5 = vector.load %arg4[%c0_6, %c0_7] : memref<16x8xf32, #tpu.memory_space<vmem>>, vector<16x8xf32>
    tpu.vector_store %arg4[%c0_6, %c0_7], %4 {strides = array<i32>} : memref<16x8xf32, #tpu.memory_space<vmem>>, vector<16x8xf32>,
    %c0_8 = arith.constant 0 : index
    %c0_9 = arith.constant 0 : index
    %6 = vector.load %arg3[%c0_8, %c0_9] : memref<128x8xf32, #tpu.memory_space<vmem>>, vector<128x8xf32>
    %cst_10 = arith.constant dense<0.000000e+00> : vector<16x8xf32>
    %7 = tpu.matmul %2, %6, %cst_10 {dimension_numbers = #tpu.dot_dimension_numbers<[1], [0], [0], [1], [0, 0, 1, 1], [], []>} : vector<16x128xf32>, vector<128x8xf32>, vector<16x8xf32> -> vector<16x8xf32>
    %c0_11 = arith.constant 0 : index
    %c0_12 = arith.constant 0 : index
    %8 = vector.load %arg5[%c0_11, %c0_12] : memref<16x8xf32, #tpu.memory_space<vmem>>, vector<16x8xf32>
    tpu.vector_store %arg5[%c0_11, %c0_12], %7 {strides = array<i32>} : memref<16x8xf32, #tpu.memory_space<vmem>>, vector<16x8xf32>,
    return
  }
  func.func @transform_0(%arg0: i32) -> (i32, i32, i32) {
    %c0_i32 = arith.constant 0 : i32
    %c0_i32_0 = arith.constant 0 : i32
    %c0_i32_1 = arith.constant 0 : i32
    return %arg0, %c0_i32, %c0_i32_0 : i32, i32, i32
  }
  func.func @transform_1(%arg0: i32) -> (i32, i32) {
    %c0_i32 = arith.constant 0 : i32
    %c0_i32_0 = arith.constant 0 : i32
    %c0_i32_1 = arith.constant 0 : i32
    return %c0_i32, %c0_i32_0 : i32, i32
  }
  func.func @transform_2(%arg0: i32) -> (i32, i32) {
    %c0_i32 = arith.constant 0 : i32
    %c0_i32_0 = arith.constant 0 : i32
    %c0_i32_1 = arith.constant 0 : i32
    return %c0_i32, %c0_i32_0 : i32, i32
  }
  func.func @transform_3(%arg0: i32) -> (i32, i32) {
    %c0_i32 = arith.constant 0 : i32
    %c0_i32_0 = arith.constant 0 : i32
    return %arg0, %c0_i32 : i32, i32
  }
  func.func @transform_4(%arg0: i32) -> (i32, i32) {
    %c0_i32 = arith.constant 0 : i32
    %c0_i32_0 = arith.constant 0 : i32
    return %arg0, %c0_i32 : i32, i32
  }
}

module attributes {stable_mosaic.version = 11 : i64} {
  func.func @_se_kernel(%arg0: memref<16x96xf32, #tpu.memory_space<vmem>>, %arg1: memref<16x96xf32, #tpu.memory_space<vmem>>, %arg2: memref<16x96xf32, #tpu.memory_space<vmem>>, %arg3: memref<1x96xf32, #tpu.memory_space<vmem>>, %arg4: memref<1x96xf32, #tpu.memory_space<vmem>>, %arg5: memref<1x96xf32, #tpu.memory_space<vmem>>, %arg6: memref<1x96xf32, #tpu.memory_space<vmem>>, %arg7: memref<1x96xf32, #tpu.memory_space<vmem>>, %arg8: memref<96x2xf32, #tpu.memory_space<vmem>>, %arg9: memref<1x2xf32, #tpu.memory_space<vmem>>, %arg10: memref<2x96xf32, #tpu.memory_space<vmem>>, %arg11: memref<1x96xf32, #tpu.memory_space<vmem>>, %arg12: memref<16x96xf32, #tpu.memory_space<vmem>>) attributes {dimension_semantics = [], scalar_prefetch = 0 : i64, scratch_operands = 0 : i64, tpu.core_type = #tpu.core_type<tc>} {
    %c0 = arith.constant 0 : index
    %c0_0 = arith.constant 0 : index
    %0 = vector.load %arg3[%c0, %c0_0] : memref<1x96xf32, #tpu.memory_space<vmem>>, vector<1x96xf32>
    %c0_1 = arith.constant 0 : index
    %c0_2 = arith.constant 0 : index
    %1 = vector.load %arg1[%c0_1, %c0_2] : memref<16x96xf32, #tpu.memory_space<vmem>>, vector<16x96xf32>
    %2 = vector.broadcast %0 : vector<1x96xf32> to vector<16x96xf32>
    %3 = arith.mulf %2, %1 : vector<16x96xf32>
    %c0_3 = arith.constant 0 : index
    %c0_4 = arith.constant 0 : index
    %4 = vector.load %arg4[%c0_3, %c0_4] : memref<1x96xf32, #tpu.memory_space<vmem>>, vector<1x96xf32>
    %c0_5 = arith.constant 0 : index
    %c0_6 = arith.constant 0 : index
    %5 = vector.load %arg0[%c0_5, %c0_6] : memref<16x96xf32, #tpu.memory_space<vmem>>, vector<16x96xf32>
    %6 = vector.broadcast %4 : vector<1x96xf32> to vector<16x96xf32>
    %7 = arith.mulf %6, %5 : vector<16x96xf32>
    %8 = arith.addf %3, %7 : vector<16x96xf32>
    %c0_7 = arith.constant 0 : index
    %c0_8 = arith.constant 0 : index
    %9 = vector.load %arg5[%c0_7, %c0_8] : memref<1x96xf32, #tpu.memory_space<vmem>>, vector<1x96xf32>
    %c0_9 = arith.constant 0 : index
    %c0_10 = arith.constant 0 : index
    %10 = vector.load %arg2[%c0_9, %c0_10] : memref<16x96xf32, #tpu.memory_space<vmem>>, vector<16x96xf32>
    %11 = vector.broadcast %9 : vector<1x96xf32> to vector<16x96xf32>
    %12 = arith.mulf %11, %10 : vector<16x96xf32>
    %13 = arith.addf %8, %12 : vector<16x96xf32>
    %c0_11 = arith.constant 0 : index
    %c0_12 = arith.constant 0 : index
    %14 = vector.load %arg6[%c0_11, %c0_12] : memref<1x96xf32, #tpu.memory_space<vmem>>, vector<1x96xf32>
    %15 = vector.broadcast %14 : vector<1x96xf32> to vector<16x96xf32>
    %16 = arith.mulf %13, %15 : vector<16x96xf32>
    %c0_13 = arith.constant 0 : index
    %c0_14 = arith.constant 0 : index
    %17 = vector.load %arg7[%c0_13, %c0_14] : memref<1x96xf32, #tpu.memory_space<vmem>>, vector<1x96xf32>
    %18 = vector.broadcast %17 : vector<1x96xf32> to vector<16x96xf32>
    %19 = arith.addf %16, %18 : vector<16x96xf32>
    %cst = arith.constant 0.000000e+00 : f32
    %20 = vector.broadcast %cst : f32 to vector<16x96xf32>
    %21 = arith.maximumf %19, %20 : vector<16x96xf32>
    %c0_15 = arith.constant 0 : index
    %c0_16 = arith.constant 0 : index
    %22 = vector.load %arg8[%c0_15, %c0_16] : memref<96x2xf32, #tpu.memory_space<vmem>>, vector<96x2xf32>
    %cst_17 = arith.constant dense<0.000000e+00> : vector<16x2xf32>
    %23 = tpu.matmul %21, %22, %cst_17 {dimension_numbers = #tpu.dot_dimension_numbers<[1], [0], [0], [1], [0, 0, 1, 1], [], []>} : vector<16x96xf32>, vector<96x2xf32>, vector<16x2xf32> -> vector<16x2xf32>
    %c0_18 = arith.constant 0 : index
    %c0_19 = arith.constant 0 : index
    %24 = vector.load %arg9[%c0_18, %c0_19] : memref<1x2xf32, #tpu.memory_space<vmem>>, vector<1x2xf32>
    %25 = vector.broadcast %24 : vector<1x2xf32> to vector<16x2xf32>
    %26 = arith.addf %23, %25 : vector<16x2xf32>
    %cst_20 = arith.constant 0.000000e+00 : f32
    %27 = vector.broadcast %cst_20 : f32 to vector<16x2xf32>
    %28 = arith.maximumf %26, %27 : vector<16x2xf32>
    %c0_21 = arith.constant 0 : index
    %c0_22 = arith.constant 0 : index
    %29 = vector.load %arg10[%c0_21, %c0_22] : memref<2x96xf32, #tpu.memory_space<vmem>>, vector<2x96xf32>
    %cst_23 = arith.constant dense<0.000000e+00> : vector<16x96xf32>
    %30 = tpu.matmul %28, %29, %cst_23 {dimension_numbers = #tpu.dot_dimension_numbers<[1], [0], [0], [1], [0, 0, 1, 1], [], []>} : vector<16x2xf32>, vector<2x96xf32>, vector<16x96xf32> -> vector<16x96xf32>
    %c0_24 = arith.constant 0 : index
    %c0_25 = arith.constant 0 : index
    %31 = vector.load %arg11[%c0_24, %c0_25] : memref<1x96xf32, #tpu.memory_space<vmem>>, vector<1x96xf32>
    %32 = vector.broadcast %31 : vector<1x96xf32> to vector<16x96xf32>
    %33 = arith.addf %30, %32 : vector<16x96xf32>
    %34 = arith.negf %33 : vector<16x96xf32>
    %35 = math.exp %34 : vector<16x96xf32>
    %cst_26 = arith.constant 1.000000e+00 : f32
    %36 = vector.broadcast %cst_26 : f32 to vector<16x96xf32>
    %37 = arith.addf %36, %35 : vector<16x96xf32>
    %38 = arith.divf %36, %37 : vector<16x96xf32>
    %c0_27 = arith.constant 0 : index
    %c0_28 = arith.constant 0 : index
    %39 = vector.load %arg12[%c0_27, %c0_28] : memref<16x96xf32, #tpu.memory_space<vmem>>, vector<16x96xf32>
    tpu.vector_store %arg12[%c0_27, %c0_28], %38 {strides = array<i32>} : memref<16x96xf32, #tpu.memory_space<vmem>>, vector<16x96xf32>,
    return
  }
}

module attributes {stable_mosaic.version = 11 : i64} {
  func.func @_mask_kernel(%arg0: i32, %arg1: memref<16x8x128xf32, #tpu.memory_space<vmem>>, %arg2: memref<16x8xf32, #tpu.memory_space<vmem>>, %arg3: memref<16x8xf32, #tpu.memory_space<vmem>>, %arg4: memref<16x16xf32, #tpu.memory_space<vmem>>, %arg5: memref<8x128xf32, #tpu.memory_space<vmem>>, %arg6: memref<16x128xf32, #tpu.memory_space<vmem>>, %arg7: memref<16x8x128xf32, #tpu.memory_space<vmem>>) attributes {dimension_semantics = [#tpu.dimension_semantics<parallel>], iteration_bounds = array<i64: 4>, scalar_prefetch = 0 : i64, scratch_operands = 0 : i64, tpu.core_type = #tpu.core_type<tc>, window_params = [{transform_indices = @transform_0, window_bounds = array<i64: 16, 8, 128>}, {transform_indices = @transform_1, window_bounds = array<i64: 16, 8>}, {transform_indices = @transform_2, window_bounds = array<i64: 16, 8>}, {transform_indices = @transform_3, window_bounds = array<i64: 16, 16>}, {pipeline_mode = #tpu.pipeline_mode<synchronous>, transform_indices = @transform_4, window_bounds = array<i64: 8, 128>}, {pipeline_mode = #tpu.pipeline_mode<synchronous>, transform_indices = @transform_5, window_bounds = array<i64: 16, 128>}, {transform_indices = @transform_6, window_bounds = array<i64: 16, 8, 128>}]} {
    %c0 = arith.constant 0 : index
    %c0_0 = arith.constant 0 : index
    %0 = vector.load %arg3[%c0, %c0_0] : memref<16x8xf32, #tpu.memory_space<vmem>>, vector<16x8xf32>
    %c0_1 = arith.constant 0 : index
    %c0_2 = arith.constant 0 : index
    %1 = vector.load %arg5[%c0_1, %c0_2] : memref<8x128xf32, #tpu.memory_space<vmem>>, vector<8x128xf32>
    %cst = arith.constant dense<0.000000e+00> : vector<16x128xf32>
    %2 = tpu.matmul %0, %1, %cst {dimension_numbers = #tpu.dot_dimension_numbers<[1], [0], [0], [1], [0, 0, 1, 1], [], []>} : vector<16x8xf32>, vector<8x128xf32>, vector<16x128xf32> -> vector<16x128xf32>
    %c0_3 = arith.constant 0 : index
    %c0_4 = arith.constant 0 : index
    %3 = vector.load %arg4[%c0_3, %c0_4] : memref<16x16xf32, #tpu.memory_space<vmem>>, vector<16x16xf32>
    %c0_5 = arith.constant 0 : index
    %c0_6 = arith.constant 0 : index
    %4 = vector.load %arg6[%c0_5, %c0_6] : memref<16x128xf32, #tpu.memory_space<vmem>>, vector<16x128xf32>
    %cst_7 = arith.constant dense<0.000000e+00> : vector<16x128xf32>
    %5 = tpu.matmul %3, %4, %cst_7 {dimension_numbers = #tpu.dot_dimension_numbers<[1], [0], [0], [1], [0, 0, 1, 1], [], []>} : vector<16x16xf32>, vector<16x128xf32>, vector<16x128xf32> -> vector<16x128xf32>
    %6 = arith.mulf %2, %5 : vector<16x128xf32>
    %c0_8 = arith.constant 0 : index
    %c0_9 = arith.constant 0 : index
    %7 = vector.load %arg2[%c0_8, %c0_9] : memref<16x8xf32, #tpu.memory_space<vmem>>, vector<16x8xf32>
    %c0_10 = arith.constant 0 : index
    %c0_11 = arith.constant 0 : index
    %c0_12 = arith.constant 0 : index
    %8 = vector.load %arg1[%c0_10, %c0_11, %c0_12] : memref<16x8x128xf32, #tpu.memory_space<vmem>>, vector<16x8x128xf32>
    %9 = vector.shape_cast %7 : vector<16x8xf32> to vector<16x8x1xf32>
    %10 = vector.broadcast %9 : vector<16x8x1xf32> to vector<16x8x128xf32>
    %11 = arith.mulf %8, %10 : vector<16x8x128xf32>
    %12 = vector.shape_cast %6 : vector<16x128xf32> to vector<16x1x128xf32>
    %13 = vector.broadcast %12 : vector<16x1x128xf32> to vector<16x8x128xf32>
    %14 = arith.mulf %11, %13 : vector<16x8x128xf32>
    %c0_13 = arith.constant 0 : index
    %c0_14 = arith.constant 0 : index
    %c0_15 = arith.constant 0 : index
    %15 = vector.load %arg7[%c0_13, %c0_14, %c0_15] : memref<16x8x128xf32, #tpu.memory_space<vmem>>, vector<16x8x128xf32>
    tpu.vector_store %arg7[%c0_13, %c0_14, %c0_15], %14 {strides = array<i32>} : memref<16x8x128xf32, #tpu.memory_space<vmem>>, vector<16x8x128xf32>,
    return
  }
  func.func @transform_0(%arg0: i32) -> (i32, i32, i32) {
    %c0_i32 = arith.constant 0 : i32
    %c0_i32_0 = arith.constant 0 : i32
    %c0_i32_1 = arith.constant 0 : i32
    return %arg0, %c0_i32, %c0_i32_0 : i32, i32, i32
  }
  func.func @transform_1(%arg0: i32) -> (i32, i32) {
    %c0_i32 = arith.constant 0 : i32
    %c0_i32_0 = arith.constant 0 : i32
    return %arg0, %c0_i32 : i32, i32
  }
  func.func @transform_2(%arg0: i32) -> (i32, i32) {
    %c0_i32 = arith.constant 0 : i32
    %c0_i32_0 = arith.constant 0 : i32
    return %arg0, %c0_i32 : i32, i32
  }
  func.func @transform_3(%arg0: i32) -> (i32, i32) {
    %c0_i32 = arith.constant 0 : i32
    %c0_i32_0 = arith.constant 0 : i32
    return %arg0, %c0_i32 : i32, i32
  }
  func.func @transform_4(%arg0: i32) -> (i32, i32) {
    %c0_i32 = arith.constant 0 : i32
    %c0_i32_0 = arith.constant 0 : i32
    %c0_i32_1 = arith.constant 0 : i32
    return %c0_i32, %c0_i32_0 : i32, i32
  }
  func.func @transform_5(%arg0: i32) -> (i32, i32) {
    %c0_i32 = arith.constant 0 : i32
    %c0_i32_0 = arith.constant 0 : i32
    %c0_i32_1 = arith.constant 0 : i32
    return %c0_i32, %c0_i32_0 : i32, i32
  }
  func.func @transform_6(%arg0: i32) -> (i32, i32, i32) {
    %c0_i32 = arith.constant 0 : i32
    %c0_i32_0 = arith.constant 0 : i32
    %c0_i32_1 = arith.constant 0 : i32
    return %arg0, %c0_i32, %c0_i32_0 : i32, i32, i32
  }
}

</mosaic_0001>

<llo_original>
// kernel: attention3d_forward.3
$region0: #{attention3d_forward.3}
  #allocation0 [shape = 'u32[]', space=smem, size = 0x4, offset = 0x4, fixed_abs, tag = 'smem constant byte address 0x4 - core index']
  #allocation1 [shape = 'u32[144,128]{1,0:T(1,128)}', space=vmem, size = 0x12000, scoped, tag = 'internal scratch']
  %s0 = inlined_call_operand.vmem [shape: f32[64,8,128], index: 0, kind: input, shape index: {}]
  %s1 = inlined_call_operand.vmem [shape: f32[8,8], index: 1, kind: input, shape index: {}]
  %s2 = inlined_call_operand.vmem [shape: f32[128,8], index: 2, kind: input, shape index: {}]
  %s3 = inlined_call_operand.vmem [shape: f32[64,8], index: 3, kind: output, shape index: {0}]
  %s4 = inlined_call_operand.vmem [shape: f32[64,8], index: 4, kind: output, shape index: {1}]
  %5 = xla_tuple %s3, %s4
  %s6 = sld [smem:[#allocation0]]
  $region53: #{attention3d_forward.3} parent=0
    _
  %s8 = ssub.s32 1, %s6
  %s9 = scalar_select 0, %s8, %s6
  loop: start=0, step=1, limit=6
  $region2: #{attention3d_forward.3} parent=0 // loop_pre_header
    _
  $region3: #{attention3d_forward.3} parent=0 // loop_header
    %s11 = sphi 0, %s15
    %p12 = scmp.ge.s32.totalorder %s11, 6
    %s21 = sphi 0, %s23
    %s24 = sphi 0, %s21
    %s25 = sphi 0, %s24
    %s41 = sphi 0, %s25
    %s45 = sphi 0, %s45
    %s47 = sphi 0, %s45
    %s48 = sphi 0, %s47
    %s62 = sphi 0, %s48
    %s66 = sphi 0, %s66
    %s68 = sphi 0, %s66
    %s69 = sphi 0, %s68
    %s83 = sphi 0, %s69
    %s89 = sphi 0, %s91
    %s92 = sphi 0, %s89
    %s93 = sphi 0, %s92
    %s109 = sphi 0, %s93
    %s115 = sphi 0, %s117
    %s118 = sphi 0, %s115
    %s119 = sphi 0, %s118
    %s135 = sphi 0, %s119
  $region4: #{attention3d_forward.3} parent=0 // loop_header_branch
    %14 = sbr.rel (%p12) target = $region8
  $region5: #{attention3d_forward.3} parent=0 // loop_body
    %s16 = ssub.s32 %s11, 1
    %s17 = ssub.s32 %s11, 2
    %s18 = sadd.s32 %s11, 1
    %s19 = ssub.s32 %s11, %s18
    %p20 = scmp.eq.s32.totalorder %s19, 0
    %s22 = sadd.s32 %s21, 1
    %s23 = scalar_select %p20, %s21, %s22
    %p26 = pneg %p20
    %p27 = scmp.eq.s32.totalorder %s11, 3
    %p28 = por %p26, %p27
    %p29 = scmp.ne.s32.totalorder %s21, %s24
    %p30 = scmp.eq.s32.totalorder %s11, 0
    %p31 = por %p29, %p30
    %p32 = scmp.ne.s32.totalorder %s21, %s24
    %p33 = scmp.eq.s32.totalorder %s16, 3
    %p34 = por %p32, %p33
    %p35 = scmp.ne.s32.totalorder %s24, %s25
    %p36 = scmp.eq.s32.totalorder %s16, 0
    %p37 = por %p35, %p36
    %p38 = scmp.ne.s32.totalorder %s24, %s25
    %p39 = scmp.eq.s32.totalorder %s17, 3
    %p40 = por %p38, %p39
    %p42 = scmp.ne.s32.totalorder %s25, %s41
    %p43 = scmp.eq.s32.totalorder %s17, 0
    %p44 = por %p42, %p43
    %s46 = sadd.s32 %s45, 1
    %p49 = scmp.eq.s32.totalorder %s11, 3
    %p50 = scmp.ne.s32.totalorder %s45, %s47
    %p51 = scmp.eq.s32.totalorder %s11, 0
    %p52 = por %p50, %p51
    %p53 = scmp.ne.s32.totalorder %s45, %s47
    %p54 = scmp.eq.s32.totalorder %s16, 3
    %p55 = por %p53, %p54
    %p56 = scmp.ne.s32.totalorder %s47, %s48
    %p57 = scmp.eq.s32.totalorder %s16, 0
    %p58 = por %p56, %p57
    %p59 = scmp.ne.s32.totalorder %s47, %s48
    %p60 = scmp.eq.s32.totalorder %s17, 3
    %p61 = por %p59, %p60
    %p63 = scmp.ne.s32.totalorder %s48, %s62
    %p64 = scmp.eq.s32.totalorder %s17, 0
    %p65 = por %p63, %p64
    %s67 = sadd.s32 %s66, 1
    %p70 = scmp.eq.s32.totalorder %s11, 3
    %p71 = scmp.ne.s32.totalorder %s66, %s68
    %p72 = scmp.eq.s32.totalorder %s11, 0
    %p73 = por %p71, %p72
    %p74 = scmp.ne.s32.totalorder %s66, %s68
    %p75 = scmp.eq.s32.totalorder %s16, 3
    %p76 = por %p74, %p75
    %p77 = scmp.ne.s32.totalorder %s68, %s69
    %p78 = scmp.eq.s32.totalorder %s16, 0
    %p79 = por %p77, %p78
    %p80 = scmp.ne.s32.totalorder %s68, %s69
    %p81 = scmp.eq.s32.totalorder %s17, 3
    %p82 = por %p80, %p81
    %p84 = scmp.ne.s32.totalorder %s69, %s83
    %p85 = scmp.eq.s32.totalorder %s17, 0
    %p86 = por %p84, %p85
    %s87 = ssub.s32 %s11, %s18
    %p88 = scmp.eq.s32.totalorder %s87, 0
    %s90 = sadd.s32 %s89, 1
    %s91 = scalar_select %p88, %s89, %s90
    %p94 = pneg %p88
    %p95 = scmp.eq.s32.totalorder %s11, 3
    %p96 = por %p94, %p95
    %p97 = scmp.ne.s32.totalorder %s89, %s92
    %p98 = scmp.eq.s32.totalorder %s11, 0
    %p99 = por %p97, %p98
    %p100 = scmp.ne.s32.totalorder %s89, %s92
    %p101 = scmp.eq.s32.totalorder %s16, 3
    %p102 = por %p100, %p101
    %p103 = scmp.ne.s32.totalorder %s92, %s93
    %p104 = scmp.eq.s32.totalorder %s16, 0
    %p105 = por %p103, %p104
    %p106 = scmp.ne.s32.totalorder %s92, %s93
    %p107 = scmp.eq.s32.totalorder %s17, 3
    %p108 = por %p106, %p107
    %p110 = scmp.ne.s32.totalorder %s93, %s109
    %p111 = scmp.eq.s32.totalorder %s17, 0
    %p112 = por %p110, %p111
    %s113 = ssub.s32 %s11, %s18
    %p114 = scmp.eq.s32.totalorder %s113, 0
    %s116 = sadd.s32 %s115, 1
    %s117 = scalar_select %p114, %s115, %s116
    %p120 = pneg %p114
    %p121 = scmp.eq.s32.totalorder %s11, 3
    %p122 = por %p120, %p121
    %p123 = scmp.ne.s32.totalorder %s115, %s118
    %p124 = scmp.eq.s32.totalorder %s11, 0
    %p125 = por %p123, %p124
    %p126 = scmp.ne.s32.totalorder %s115, %s118
    %p127 = scmp.eq.s32.totalorder %s16, 3
    %p128 = por %p126, %p127
    %p129 = scmp.ne.s32.totalorder %s118, %s119
    %p130 = scmp.eq.s32.totalorder %s16, 0
    %p131 = por %p129, %p130
    %p132 = scmp.ne.s32.totalorder %s118, %s119
    %p133 = scmp.eq.s32.totalorder %s17, 3
    %p134 = por %p132, %p133
    %p136 = scmp.ne.s32.totalorder %s119, %s135
    %p137 = scmp.eq.s32.totalorder %s17, 0
    %p138 = por %p136, %p137
    %p139 = scmp.le.s32.totalorder 1, %s11
    %p140 = scmp.lt.s32.totalorder %s11, 5
    %p141 = pnand %p139, %p140
    %p142 = pneg %p141
    // Predicated region
    $region9: #{attention3d_forward.3} parent=5 // pred_check
      _
    $region10: #{attention3d_forward.3} parent=5 // pred_check_branch
      %144 = sbr.rel (%p141) target = $region12
    $region11: #{attention3d_forward.3} parent=5 // pred_region
      %s145 = ssub.s32 %s11, 1
      // Predicated region
      $region13: #{attention3d_forward.3} parent=11 // pred_check
        %p146 = pneg %p58
      $region14: #{attention3d_forward.3} parent=11 // pred_check_branch
        %148 = sbr.rel (%p146) target = $region16
      $region15: #{attention3d_forward.3} parent=11 // pred_region
        _
      $region16: #{attention3d_forward.3} parent=11 // pred_fallthru
        _
      // Predicated region
      $region17: #{attention3d_forward.3} parent=11 // pred_check
        %p149 = pneg %p79
      $region18: #{attention3d_forward.3} parent=11 // pred_check_branch
        %151 = sbr.rel (%p149) target = $region20
      $region19: #{attention3d_forward.3} parent=11 // pred_region
        _
      $region20: #{attention3d_forward.3} parent=11 // pred_fallthru
        _
    $region12: #{attention3d_forward.3} parent=5 // pred_fallthru
      _
    %p152 = scmp.lt.s32.totalorder %s11, 4
    // Predicated region
    $region21: #{attention3d_forward.3} parent=5 // pred_check
      %p153 = pneg %p152
    $region22: #{attention3d_forward.3} parent=5 // pred_check_branch
      %155 = sbr.rel (%p153) target = $region24
    $region23: #{attention3d_forward.3} parent=5 // pred_region
      // Predicated region
      $region25: #{attention3d_forward.3} parent=23 // pred_check
        %p156 = pneg %p31
      $region26: #{attention3d_forward.3} parent=23 // pred_check_branch
        %158 = sbr.rel (%p156) target = $region28
      $region27: #{attention3d_forward.3} parent=23 // pred_region
        %s159 = smul.u32 16, %s11
        %p160 = scmp.lt.s32.totalorder %s159, 63
        %s161 = scalar_select %p160, %s159, 63
        %s162 = smul.addr %s161, 8
        %s163 = scalar_lea.vmem %s0, %s162
        %s164 = smul.u32 16, %s11
      $region28: #{attention3d_forward.3} parent=23 // pred_fallthru
        _
    $region24: #{attention3d_forward.3} parent=5 // pred_fallthru
      _
    %p165 = scmp.le.s32.totalorder 1, %s11
    %p166 = scmp.lt.s32.totalorder %s11, 5
    %p167 = pnand %p165, %p166
    %p168 = pneg %p167
    // Predicated region
    $region29: #{attention3d_forward.3} parent=5 // pred_check
      _
    $region30: #{attention3d_forward.3} parent=5 // pred_check_branch
      %170 = sbr.rel (%p167) target = $region32
    $region31: #{attention3d_forward.3} parent=5 // pred_region
      %s171 = ssub.s32 %s11, 1
      %s172 = smul.u32 16, %s16
      %p173 = scmp.lt.s32.totalorder %s172, 63
      %s174 = scalar_select %p173, %s172, 63
      %s175 = smul.addr %s174, 8
      %s176 = scalar_lea.vmem %s0, %s175
      %p177 = pneg %p37
      %p178 = pneg %p34
      %p179 = pneg %p58
      %p180 = pneg %p55
      %p181 = pneg %p79
      %p182 = pneg %p76
      %p183 = pneg %p105
      %p184 = pneg %p102
      %s185 = smul.u32 2, %s16
      %p186 = scmp.lt.s32.totalorder %s185, 7
      %s187 = scalar_select %p186, %s185, 7
      %s188 = smul.addr %s187, 8
      %s189 = scalar_lea.vmem %s3, %s188
      %p190 = pneg %p131
      %p191 = pneg %p128
      %s192 = smul.u32 2, %s16
      %p193 = scmp.lt.s32.totalorder %s192, 7
      %s194 = scalar_select %p193, %s192, 7
      %s195 = smul.addr %s194, 8
      %s196 = scalar_lea.vmem %s4, %s195
      %s197 = smul.u32 16, %s16
      %p198 = scmp.lt.s32.totalorder %s197, 63
      %s199 = scalar_select %p198, %s197, 63
      %s200 = smul.addr %s199, 8
      %s201 = scalar_lea.vmem %s0, %s200
      %s202 = smul.u32 16, %s16
      %s203 = smul.u32 2, %s16
      %p204 = scmp.lt.s32.totalorder %s203, 7
      %s205 = scalar_select %p204, %s203, 7
      %s206 = smul.addr %s205, 8
      %s207 = scalar_lea.vmem %s3, %s206
      %s208 = smul.u32 2, %s16
      %s209 = smul.u32 2, %s16
      %p210 = scmp.lt.s32.totalorder %s209, 7
      %s211 = scalar_select %p210, %s209, 7
      %s212 = smul.addr %s211, 8
      %s213 = scalar_lea.vmem %s4, %s212
      %s214 = smul.u32 2, %s16
      %v215 = vld [vmem:[%s201] sm:$0xff]
      %v216 = vld [vmem:[%s201 + $0x8] sm:$0xff]
      %v217 = vld [vmem:[%s201 + $0x10] sm:$0xff]
      %v218 = vld [vmem:[%s201 + $0x18] sm:$0xff]
      %v219 = vld [vmem:[%s201 + $0x20] sm:$0xff]
      %v220 = vld [vmem:[%s201 + $0x28] sm:$0xff]
      %v221 = vld [vmem:[%s201 + $0x30] sm:$0xff]
      %v222 = vld [vmem:[%s201 + $0x38] sm:$0xff]
      %v223 = vld [vmem:[%s201 + $0x40] sm:$0xff]
      %v224 = vld [vmem:[%s201 + $0x48] sm:$0xff]
      %v225 = vld [vmem:[%s201 + $0x50] sm:$0xff]
      %v226 = vld [vmem:[%s201 + $0x58] sm:$0xff]
      %v227 = vld [vmem:[%s201 + $0x60] sm:$0xff]
      %v228 = vld [vmem:[%s201 + $0x68] sm:$0xff]
      %v229 = vld [vmem:[%s201 + $0x70] sm:$0xff]
      %v230 = vld [vmem:[%s201 + $0x78] sm:$0xff]
      %231 = vadd.xlane.f32.xlu0 %v215
      %v232 = vpop.xlane.xlu0 %231
      %233 = vadd.xlane.f32.xlu0 %v216
      %v234 = vpop.xlane.xlu0 %233
      %235 = vadd.xlane.f32.xlu0 %v217
      %v236 = vpop.xlane.xlu0 %235
      %237 = vadd.xlane.f32.xlu0 %v218
      %v238 = vpop.xlane.xlu0 %237
      %239 = vadd.xlane.f32.xlu0 %v219
      %v240 = vpop.xlane.xlu0 %239
      %241 = vadd.xlane.f32.xlu0 %v220
      %v242 = vpop.xlane.xlu0 %241
      %243 = vadd.xlane.f32.xlu0 %v221
      %v244 = vpop.xlane.xlu0 %243
      %245 = vadd.xlane.f32.xlu0 %v222
      %v246 = vpop.xlane.xlu0 %245
      %247 = vadd.xlane.f32.xlu0 %v223
      %v248 = vpop.xlane.xlu0 %247
      %249 = vadd.xlane.f32.xlu0 %v224
      %v250 = vpop.xlane.xlu0 %249
      %251 = vadd.xlane.f32.xlu0 %v225
      %v252 = vpop.xlane.xlu0 %251
      %253 = vadd.xlane.f32.xlu0 %v226
      %v254 = vpop.xlane.xlu0 %253
      %255 = vadd.xlane.f32.xlu0 %v227
      %v256 = vpop.xlane.xlu0 %255
      %257 = vadd.xlane.f32.xlu0 %v228
      %v258 = vpop.xlane.xlu0 %257
      %259 = vadd.xlane.f32.xlu0 %v229
      %v260 = vpop.xlane.xlu0 %259
      %261 = vadd.xlane.f32.xlu0 %v230
      %v262 = vpop.xlane.xlu0 %261
      %v263 = vrot.slane %v215, 4
      %v264 = vadd.f32 %v215, %v263
      %v265 = vrot.slane %v264, 2
      %v266 = vadd.f32 %v264, %v265
      %v267 = vrot.slane %v266, 1
      %v268 = vadd.f32 %v266, %v267
      %v269 = vrot.slane %v216, 4
      %v270 = vadd.f32 %v216, %v269
      %v271 = vrot.slane %v270, 2
      %v272 = vadd.f32 %v270, %v271
      %v273 = vrot.slane %v272, 1
      %v274 = vadd.f32 %v272, %v273
      %v275 = vrot.slane %v217, 4
      %v276 = vadd.f32 %v217, %v275
      %v277 = vrot.slane %v276, 2
      %v278 = vadd.f32 %v276, %v277
      %v279 = vrot.slane %v278, 1
      %v280 = vadd.f32 %v278, %v279
      %v281 = vrot.slane %v218, 4
      %v282 = vadd.f32 %v218, %v281
      %v283 = vrot.slane %v282, 2
      %v284 = vadd.f32 %v282, %v283
      %v285 = vrot.slane %v284, 1
      %v286 = vadd.f32 %v284, %v285
      %v287 = vrot.slane %v219, 4
      %v288 = vadd.f32 %v219, %v287
      %v289 = vrot.slane %v288, 2
      %v290 = vadd.f32 %v288, %v289
      %v291 = vrot.slane %v290, 1
      %v292 = vadd.f32 %v290, %v291
      %v293 = vrot.slane %v220, 4
      %v294 = vadd.f32 %v220, %v293
      %v295 = vrot.slane %v294, 2
      %v296 = vadd.f32 %v294, %v295
      %v297 = vrot.slane %v296, 1
      %v298 = vadd.f32 %v296, %v297
      %v299 = vrot.slane %v221, 4
      %v300 = vadd.f32 %v221, %v299
      %v301 = vrot.slane %v300, 2
      %v302 = vadd.f32 %v300, %v301
      %v303 = vrot.slane %v302, 1
      %v304 = vadd.f32 %v302, %v303
      %v305 = vrot.slane %v222, 4
      %v306 = vadd.f32 %v222, %v305
      %v307 = vrot.slane %v306, 2
      %v308 = vadd.f32 %v306, %v307
      %v309 = vrot.slane %v308, 1
      %v310 = vadd.f32 %v308, %v309
      %v311 = vrot.slane %v223, 4
      %v312 = vadd.f32 %v223, %v311
      %v313 = vrot.slane %v312, 2
      %v314 = vadd.f32 %v312, %v313
      %v315 = vrot.slane %v314, 1
      %v316 = vadd.f32 %v314, %v315
      %v317 = vrot.slane %v224, 4
      %v318 = vadd.f32 %v224, %v317
      %v319 = vrot.slane %v318, 2
      %v320 = vadd.f32 %v318, %v319
      %v321 = vrot.slane %v320, 1
      %v322 = vadd.f32 %v320, %v321
      %v323 = vrot.slane %v225, 4
      %v324 = vadd.f32 %v225, %v323
      %v325 = vrot.slane %v324, 2
      %v326 = vadd.f32 %v324, %v325
      %v327 = vrot.slane %v326, 1
      %v328 = vadd.f32 %v326, %v327
      %v329 = vrot.slane %v226, 4
      %v330 = vadd.f32 %v226, %v329
      %v331 = vrot.slane %v330, 2
      %v332 = vadd.f32 %v330, %v331
      %v333 = vrot.slane %v332, 1
      %v334 = vadd.f32 %v332, %v333
      %v335 = vrot.slane %v227, 4
      %v336 = vadd.f32 %v227, %v335
      %v337 = vrot.slane %v336, 2
      %v338 = vadd.f32 %v336, %v337
      %v339 = vrot.slane %v338, 1
      %v340 = vadd.f32 %v338, %v339
      %v341 = vrot.slane %v228, 4
      %v342 = vadd.f32 %v228, %v341
      %v343 = vrot.slane %v342, 2
      %v344 = vadd.f32 %v342, %v343
      %v345 = vrot.slane %v344, 1
      %v346 = vadd.f32 %v344, %v345
      %v347 = vrot.slane %v229, 4
      %v348 = vadd.f32 %v229, %v347
      %v349 = vrot.slane %v348, 2
      %v350 = vadd.f32 %v348, %v349
      %v351 = vrot.slane %v350, 1
      %v352 = vadd.f32 %v350, %v351
      %v353 = vrot.slane %v230, 4
      %v354 = vadd.f32 %v230, %v353
      %v355 = vrot.slane %v354, 2
      %v356 = vadd.f32 %v354, %v355
      %v357 = vrot.slane %v356, 1
      %v358 = vadd.f32 %v356, %v357
      %v359 = vld [vmem:[%s1] sm:$0xff]
      %v376 = vlaneseq
      %v377 = vand.u32 %v376, 127
      %v378 = vlaneseq
      %v379 = vshrl.u32 %v378, 7
      %v380 = vsub.s32 %v377, %v379
      %v381 = vrot.slane %v232, %v380
      %v382 = vlaneseq
      %v383 = vshrl.u32 %v382, 7
      %v384 = vsub.s32 %v377, %v383
      %v385 = vrot.slane %v234, %v384
      %v386 = vlaneseq
      %v387 = vshrl.u32 %v386, 7
      %v388 = vsub.s32 %v377, %v387
      %v389 = vrot.slane %v236, %v388
      %v390 = vlaneseq
      %v391 = vshrl.u32 %v390, 7
      %v392 = vsub.s32 %v377, %v391
      %v393 = vrot.slane %v238, %v392
      %v394 = vlaneseq
      %v395 = vshrl.u32 %v394, 7
      %v396 = vsub.s32 %v377, %v395
      %v397 = vrot.slane %v240, %v396
      %v398 = vlaneseq
      %v399 = vshrl.u32 %v398, 7
      %v400 = vsub.s32 %v377, %v399
      %v401 = vrot.slane %v242, %v400
      %v402 = vlaneseq
      %v403 = vshrl.u32 %v402, 7
      %v404 = vsub.s32 %v377, %v403
      %v405 = vrot.slane %v244, %v404
      %v406 = vlaneseq
      %v407 = vshrl.u32 %v406, 7
      %v408 = vsub.s32 %v377, %v407
      %v409 = vrot.slane %v246, %v408
      %v410 = vlaneseq
      %v411 = vshrl.u32 %v410, 7
      %v412 = vsub.s32 %v377, %v411
      %v413 = vrot.slane %v248, %v412
      %v414 = vlaneseq
      %v415 = vshrl.u32 %v414, 7
      %v416 = vsub.s32 %v377, %v415
      %v417 = vrot.slane %v250, %v416
      %v418 = vlaneseq
      %v419 = vshrl.u32 %v418, 7
      %v420 = vsub.s32 %v377, %v419
      %v421 = vrot.slane %v252, %v420
      %v422 = vlaneseq
      %v423 = vshrl.u32 %v422, 7
      %v424 = vsub.s32 %v377, %v423
      %v425 = vrot.slane %v254, %v424
      %v426 = vlaneseq
      %v427 = vshrl.u32 %v426, 7
      %v428 = vsub.s32 %v377, %v427
      %v429 = vrot.slane %v256, %v428
      %v430 = vlaneseq
      %v431 = vshrl.u32 %v430, 7
      %v432 = vsub.s32 %v377, %v431
      %v433 = vrot.slane %v258, %v432
      %v434 = vlaneseq
      %v435 = vshrl.u32 %v434, 7
      %v436 = vsub.s32 %v377, %v435
      %v437 = vrot.slane %v260, %v436
      %v438 = vlaneseq
      %v439 = vshrl.u32 %v438, 7
      %v440 = vsub.s32 %v377, %v439
      %v441 = vrot.slane %v262, %v440
      %vm442 = vcmask 1041409
      %v443 = vsel %vm442, %v385, %v381
      %vm444 = vcmask 1042434
      %v445 = vsel %vm444, %v389, %v443
      %vm446 = vcmask 1043459
      %v447 = vsel %vm446, %v393, %v445
      %vm448 = vcmask 1044484
      %v449 = vsel %vm448, %v397, %v447
      %vm450 = vcmask 1045509
      %v451 = vsel %vm450, %v401, %v449
      %vm452 = vcmask 1046534
      %v453 = vsel %vm452, %v405, %v451
      %vm454 = vcmask 1047559
      %v455 = vsel %vm454, %v409, %v453
      %v456 = vsel %vm442, %v417, %v413
      %v457 = vsel %vm444, %v421, %v456
      %v458 = vsel %vm446, %v425, %v457
      %v459 = vsel %vm448, %v429, %v458
      %v460 = vsel %vm450, %v433, %v459
      %v461 = vsel %vm452, %v437, %v460
      %v462 = vsel %vm454, %v441, %v461
      %vm463 = vcmask 64512
      %v464 = vsel %vm463, %v455, 0
      %v466 = vsel %vm463, %v462, 0
      %468 = vmatprep.subr.mxu0 0.0
      %469 = vmatpush1.msra.mxu0 %v359
      %470 = vmatprep.subr.mxu0 0.0
      %471 = vmatpush1.msra.mxu0 0.0
      %472 = vmatprep.subr.mxu0 0.0
      %473 = vmatpush1.msra.mxu0 0.0
      %474 = vmatprep.subr.mxu0 0.0
      %475 = vmatpush1.msra.mxu0 0.0
      %476 = vmatprep.subr.mxu0 0.0
      %477 = vmatpush1.msra.mxu0 0.0
      %478 = vmatprep.subr.mxu0 0.0
      %479 = vmatpush1.msra.mxu0 0.0
      %480 = vmatprep.subr.mxu0 0.0
      %481 = vmatpush1.msra.mxu0 0.0
      %482 = vmatprep.subr.mxu0 0.0
      %483 = vmatpush1.msra.mxu0 0.0
      %484 = vmatprep.subr.mxu0 0.0
      %485 = vmatpush1.msra.mxu0 0.0
      %486 = vmatprep.subr.mxu0 0.0
      %487 = vmatpush1.msra.mxu0 0.0
      %488 = vmatprep.subr.mxu0 0.0
      %489 = vmatpush1.msra.mxu0 0.0
      %490 = vmatprep.subr.mxu0 0.0
      %491 = vmatpush1.msra.mxu0 0.0
      %492 = vmatprep.subr.mxu0 0.0
      %493 = vmatpush1.msra.mxu0 0.0
      %494 = vmatprep.subr.mxu0 0.0
      %495 = vmatpush1.msra.mxu0 0.0
      %496 = vmatprep.subr.mxu0 0.0
      %497 = vmatpush1.msra.mxu0 0.0
      %498 = vmatprep.subr.mxu0 0.0
      %499 = vmatpush1.msra.mxu0 0.0
      %500 = vmatprep.subr.mxu0 0.0
      %501 = vmatpush1.msra.mxu0 0.0
      %502 = vmatprep.subr.mxu0 0.0
      %503 = vmatpush1.msra.mxu0 0.0
      %504 = vmatprep.subr.mxu0 0.0
      %505 = vmatpush1.msra.mxu0 0.0
      %506 = vmatprep.subr.mxu0 0.0
      %507 = vmatpush1.msra.mxu0 0.0
      %508 = vmatprep.subr.mxu0 0.0
      %509 = vmatpush1.msra.mxu0 0.0
      %510 = vmatprep.subr.mxu0 0.0
      %511 = vmatpush1.msra.mxu0 0.0
      %512 = vmatprep.subr.mxu0 0.0
      %513 = vmatpush1.msra.mxu0 0.0
      %514 = vmatprep.subr.mxu0 0.0
      %515 = vmatpush1.msra.mxu0 0.0
      %516 = vmatprep.subr.mxu0 0.0
      %517 = vmatpush1.msra.mxu0 0.0
      %518 = vmatprep.subr.mxu0 0.0
      %519 = vmatpush1.msra.mxu0 0.0
      %520 = vmatprep.subr.mxu0 0.0
      %521 = vmatpush1.msra.mxu0 0.0
      %522 = vmatprep.subr.mxu0 0.0
      %523 = vmatpush1.msra.mxu0 0.0
      %524 = vmatprep.subr.mxu0 0.0
      %525 = vmatpush1.msra.mxu0 0.0
      %526 = vmatprep.subr.mxu0 0.0
      %527 = vmatpush1.msra.mxu0 0.0
      %528 = vmatprep.subr.mxu0 0.0
      %529 = vmatpush1.msra.mxu0 0.0
      %530 = vmatprep.subr.mxu0 0.0
      %531 = vmatpush1.msra.mxu0 0.0
      %532 = vmatprep.mubr.f32.mxu0 0.0
      %533 = vmatmul.mubr.f32.gmra.mrb[0].mxu0 %v464
      %v534 = vpop.f32.mrb[0].mxu0
      %v535 = vadd.f32 0.0, %v534
      %v536 = vpop.f32.mrb[0].mxu0
      %537 = vmatprep.mubr.f32.mxu0 0.0
      %538 = vmatmul.mubr.f32.gmra.mrb[0].mxu0 %v466
      %v539 = vpop.f32.mrb[0].mxu0
      %v540 = vadd.f32 0.0, %v539
      %v541 = vpop.f32.mrb[0].mxu0
      %542 = vdwg.mxu0
      %543 = vst.msk [vmem:[%s207] sm:$0xff] %vm463, %v535
      %544 = vst.msk [vmem:[%s207 + $0x8] sm:$0xff] %vm463, %v540
      %v545 = vld [vmem:[%s2] sm:$0xff]
      %v546 = vld [vmem:[%s2 + $0x8] sm:$0xff]
      %v547 = vld [vmem:[%s2 + $0x10] sm:$0xff]
      %v548 = vld [vmem:[%s2 + $0x18] sm:$0xff]
      %v549 = vld [vmem:[%s2 + $0x20] sm:$0xff]
      %v550 = vld [vmem:[%s2 + $0x28] sm:$0xff]
      %v551 = vld [vmem:[%s2 + $0x30] sm:$0xff]
      %v552 = vld [vmem:[%s2 + $0x38] sm:$0xff]
      %v553 = vld [vmem:[%s2 + $0x40] sm:$0xff]
      %v554 = vld [vmem:[%s2 + $0x48] sm:$0xff]
      %v555 = vld [vmem:[%s2 + $0x50] sm:$0xff]
      %v556 = vld [vmem:[%s2 + $0x58] sm:$0xff]
      %v557 = vld [vmem:[%s2 + $0x60] sm:$0xff]
      %v558 = vld [vmem:[%s2 + $0x68] sm:$0xff]
      %v559 = vld [vmem:[%s2 + $0x70] sm:$0xff]
      %v560 = vld [vmem:[%s2 + $0x78] sm:$0xff]
      %v577 = vsel %vm442, %v274, %v268
      %v578 = vsel %vm444, %v280, %v577
      %v579 = vsel %vm446, %v286, %v578
      %v580 = vsel %vm448, %v292, %v579
      %v581 = vsel %vm450, %v298, %v580
      %v582 = vsel %vm452, %v304, %v581
      %v583 = vsel %vm454, %v310, %v582
      %v584 = vsel %vm442, %v322, %v316
      %v585 = vsel %vm444, %v328, %v584
      %v586 = vsel %vm446, %v334, %v585
      %v587 = vsel %vm448, %v340, %v586
      %v588 = vsel %vm450, %v346, %v587
      %v589 = vsel %vm452, %v352, %v588
      %v590 = vsel %vm454, %v358, %v589
      %593 = vmatprep.subr.mxu0 0.0
      %594 = vmatpush1.msra.mxu0 %v545
      %595 = vmatprep.subr.mxu0 0.0
      %596 = vmatpush1.msra.mxu0 %v546
      %597 = vmatprep.subr.mxu0 0.0
      %598 = vmatpush1.msra.mxu0 %v547
      %599 = vmatprep.subr.mxu0 0.0
      %600 = vmatpush1.msra.mxu0 %v548
      %601 = vmatprep.subr.mxu0 0.0
      %602 = vmatpush1.msra.mxu0 %v549
      %603 = vmatprep.subr.mxu0 0.0
      %604 = vmatpush1.msra.mxu0 %v550
      %605 = vmatprep.subr.mxu0 0.0
      %606 = vmatpush1.msra.mxu0 %v551
      %607 = vmatprep.subr.mxu0 0.0
      %608 = vmatpush1.msra.mxu0 %v552
      %609 = vmatprep.subr.mxu0 0.0
      %610 = vmatpush1.msra.mxu0 %v553
      %611 = vmatprep.subr.mxu0 0.0
      %612 = vmatpush1.msra.mxu0 %v554
      %613 = vmatprep.subr.mxu0 0.0
      %614 = vmatpush1.msra.mxu0 %v555
      %615 = vmatprep.subr.mxu0 0.0
      %616 = vmatpush1.msra.mxu0 %v556
      %617 = vmatprep.subr.mxu0 0.0
      %618 = vmatpush1.msra.mxu0 %v557
      %619 = vmatprep.subr.mxu0 0.0
      %620 = vmatpush1.msra.mxu0 %v558
      %621 = vmatprep.subr.mxu0 0.0
      %622 = vmatpush1.msra.mxu0 %v559
      %623 = vmatprep.subr.mxu0 0.0
      %624 = vmatpush1.msra.mxu0 %v560
      %625 = vmatprep.subr.mxu0 0.0
      %626 = vmatpush1.msra.mxu0 0.0
      %627 = vmatprep.subr.mxu0 0.0
      %628 = vmatpush1.msra.mxu0 0.0
      %629 = vmatprep.subr.mxu0 0.0
      %630 = vmatpush1.msra.mxu0 0.0
      %631 = vmatprep.subr.mxu0 0.0
      %632 = vmatpush1.msra.mxu0 0.0
      %633 = vmatprep.subr.mxu0 0.0
      %634 = vmatpush1.msra.mxu0 0.0
      %635 = vmatprep.subr.mxu0 0.0
      %636 = vmatpush1.msra.mxu0 0.0
      %637 = vmatprep.subr.mxu0 0.0
      %638 = vmatpush1.msra.mxu0 0.0
      %639 = vmatprep.subr.mxu0 0.0
      %640 = vmatpush1.msra.mxu0 0.0
      %641 = vmatprep.subr.mxu0 0.0
      %642 = vmatpush1.msra.mxu0 0.0
      %643 = vmatprep.subr.mxu0 0.0
      %644 = vmatpush1.msra.mxu0 0.0
      %645 = vmatprep.subr.mxu0 0.0
      %646 = vmatpush1.msra.mxu0 0.0
      %647 = vmatprep.subr.mxu0 0.0
      %648 = vmatpush1.msra.mxu0 0.0
      %649 = vmatprep.subr.mxu0 0.0
      %650 = vmatpush1.msra.mxu0 0.0
      %651 = vmatprep.subr.mxu0 0.0
      %652 = vmatpush1.msra.mxu0 0.0
      %653 = vmatprep.subr.mxu0 0.0
      %654 = vmatpush1.msra.mxu0 0.0
      %655 = vmatprep.subr.mxu0 0.0
      %656 = vmatpush1.msra.mxu0 0.0
      %657 = vmatprep.mubr.f32.mxu0 0.0
      %658 = vmatmul.mubr.f32.gmra.mrb[0].mxu0 %v583
      %v659 = vpop.f32.mrb[0].mxu0
      %v660 = vadd.f32 0.0, %v659
      %v661 = vpop.f32.mrb[0].mxu0
      %662 = vmatprep.mubr.f32.mxu0 0.0
      %663 = vmatmul.mubr.f32.gmra.mrb[0].mxu0 %v590
      %v664 = vpop.f32.mrb[0].mxu0
      %v665 = vadd.f32 0.0, %v664
      %v666 = vpop.f32.mrb[0].mxu0
      %667 = vdwg.mxu0
      %668 = vst.msk [vmem:[%s213] sm:$0xff] %vm463, %v660
      %669 = vst.msk [vmem:[%s213 + $0x8] sm:$0xff] %vm463, %v665
      %s670 = smul.u32 2, %s16
      %p671 = scmp.lt.s32.totalorder %s670, 7
      %s672 = scalar_select %p671, %s670, 7
      %s673 = smul.addr %s672, 8
      %s674 = scalar_lea.vmem %s3, %s673
      %s675 = smul.u32 2, %s16
      %p676 = scmp.lt.s32.totalorder %s675, 7
      %s677 = scalar_select %p676, %s675, 7
      %s678 = smul.addr %s677, 8
      %s679 = scalar_lea.vmem %s4, %s678
      // Predicated region
      $region33: #{attention3d_forward.3} parent=31 // pred_check
        %p680 = pneg %p102
      $region34: #{attention3d_forward.3} parent=31 // pred_check_branch
        %682 = sbr.rel (%p680) target = $region36
      $region35: #{attention3d_forward.3} parent=31 // pred_region
        %s683 = smul.u32 2, %s16
      $region36: #{attention3d_forward.3} parent=31 // pred_fallthru
        _
      // Predicated region
      $region37: #{attention3d_forward.3} parent=31 // pred_check
        %p684 = pneg %p128
      $region38: #{attention3d_forward.3} parent=31 // pred_check_branch
        %686 = sbr.rel (%p684) target = $region40
      $region39: #{attention3d_forward.3} parent=31 // pred_region
        %s687 = smul.u32 2, %s16
      $region40: #{attention3d_forward.3} parent=31 // pred_fallthru
        _
    $region32: #{attention3d_forward.3} parent=5 // pred_fallthru
      _
    %p688 = scmp.le.s32.totalorder 2, %s11
    // Predicated region
    $region41: #{attention3d_forward.3} parent=5 // pred_check
      %p689 = pneg %p688
    $region42: #{attention3d_forward.3} parent=5 // pred_check_branch
      %691 = sbr.rel (%p689) target = $region44
    $region43: #{attention3d_forward.3} parent=5 // pred_region
      %s692 = ssub.s32 %s11, 2
      // Predicated region
      $region45: #{attention3d_forward.3} parent=43 // pred_check
        %p693 = pneg %p108
      $region46: #{attention3d_forward.3} parent=43 // pred_check_branch
        %695 = sbr.rel (%p693) target = $region48
      $region47: #{attention3d_forward.3} parent=43 // pred_region
        %s696 = smul.u32 2, %s17
        %p697 = scmp.lt.s32.totalorder %s696, 7
        %s698 = scalar_select %p697, %s696, 7
        %s699 = smul.addr %s698, 8
        %s700 = scalar_lea.vmem %s3, %s699
      $region48: #{attention3d_forward.3} parent=43 // pred_fallthru
        _
      // Predicated region
      $region49: #{attention3d_forward.3} parent=43 // pred_check
        %p701 = pneg %p134
      $region50: #{attention3d_forward.3} parent=43 // pred_check_branch
        %703 = sbr.rel (%p701) target = $region52
      $region51: #{attention3d_forward.3} parent=43 // pred_region
        %s704 = smul.u32 2, %s17
        %p705 = scmp.lt.s32.totalorder %s704, 7
        %s706 = scalar_select %p705, %s704, 7
        %s707 = smul.addr %s706, 8
        %s708 = scalar_lea.vmem %s4, %s707
      $region52: #{attention3d_forward.3} parent=43 // pred_fallthru
        _
    $region44: #{attention3d_forward.3} parent=5 // pred_fallthru
      _
  $region6: #{attention3d_forward.3} parent=0 // loop_footer
    %s15 = sadd.s32 1, %s11
  $region7: #{attention3d_forward.3} parent=0 // loop_footer_branch
    %10 = sbr.rel target = $region3
  $region8: #{attention3d_forward.3} parent=0 // loop_exit
    _

// kernel: attention3d_forward.4
$region0: #{attention3d_forward.4}
  #allocation0 [shape = 'u32[]', space=smem, size = 0x4, offset = 0x4, fixed_abs, tag = 'smem constant byte address 0x4 - core index']
  #allocation1 [shape = 'u32[144,128]{1,0:T(1,128)}', space=vmem, size = 0x12000, scoped, tag = 'internal scratch']
  %s0 = inlined_call_operand.vmem [shape: f32[16,96], index: 0, kind: input, shape index: {}]
  %s1 = inlined_call_operand.vmem [shape: f32[16,96], index: 1, kind: input, shape index: {}]
  %s2 = inlined_call_operand.vmem [shape: f32[16,96], index: 2, kind: input, shape index: {}]
  %s3 = inlined_call_operand.vmem [shape: f32[1,96], index: 3, kind: input, shape index: {}]
  %s4 = inlined_call_operand.vmem [shape: f32[1,96], index: 4, kind: input, shape index: {}]
  %s5 = inlined_call_operand.vmem [shape: f32[1,96], index: 5, kind: input, shape index: {}]
  %s6 = inlined_call_operand.vmem [shape: f32[1,96], index: 6, kind: input, shape index: {}]
  %s7 = inlined_call_operand.vmem [shape: f32[1,96], index: 7, kind: input, shape index: {}]
  %s8 = inlined_call_operand.vmem [shape: f32[96,2], index: 8, kind: input, shape index: {}]
  %s9 = inlined_call_operand.vmem [shape: f32[1,2], index: 9, kind: input, shape index: {}]
  %s10 = inlined_call_operand.vmem [shape: f32[2,96], index: 10, kind: input, shape index: {}]
  %s11 = inlined_call_operand.vmem [shape: f32[1,96], index: 11, kind: input, shape index: {}]
  %s12 = inlined_call_operand.vmem [shape: f32[16,96], index: 12, kind: output, shape index: {}]
  %s13 = sld [smem:[#allocation0]]
  $region58: #{attention3d_forward.4} parent=0
    _
  %s15 = ssub.s32 1, %s13
  %s16 = scalar_select 0, %s15, %s13
  // Predicated region
  $region2: #{attention3d_forward.4} parent=0 // pred_check
    _
  $region3: #{attention3d_forward.4} parent=0 // pred_check_branch
    %18 = sbr.rel (0) target = $region5
  $region4: #{attention3d_forward.4} parent=0 // pred_region
    _
  $region5: #{attention3d_forward.4} parent=0 // pred_fallthru
    _
  // Predicated region
  $region6: #{attention3d_forward.4} parent=0 // pred_check
    _
  $region7: #{attention3d_forward.4} parent=0 // pred_check_branch
    %20 = sbr.rel (0) target = $region9
  $region8: #{attention3d_forward.4} parent=0 // pred_region
    _
  $region9: #{attention3d_forward.4} parent=0 // pred_fallthru
    _
  // Predicated region
  $region10: #{attention3d_forward.4} parent=0 // pred_check
    _
  $region11: #{attention3d_forward.4} parent=0 // pred_check_branch
    %22 = sbr.rel (0) target = $region13
  $region12: #{attention3d_forward.4} parent=0 // pred_region
    _
  $region13: #{attention3d_forward.4} parent=0 // pred_fallthru
    _
  // Predicated region
  $region14: #{attention3d_forward.4} parent=0 // pred_check
    _
  $region15: #{attention3d_forward.4} parent=0 // pred_check_branch
    %24 = sbr.rel (0) target = $region17
  $region16: #{attention3d_forward.4} parent=0 // pred_region
    _
  $region17: #{attention3d_forward.4} parent=0 // pred_fallthru
    _
  // Predicated region
  $region18: #{attention3d_forward.4} parent=0 // pred_check
    _
  $region19: #{attention3d_forward.4} parent=0 // pred_check_branch
    %26 = sbr.rel (0) target = $region21
  $region20: #{attention3d_forward.4} parent=0 // pred_region
    _
  $region21: #{attention3d_forward.4} parent=0 // pred_fallthru
    _
  // Predicated region
  $region22: #{attention3d_forward.4} parent=0 // pred_check
    _
  $region23: #{attention3d_forward.4} parent=0 // pred_check_branch
    %28 = sbr.rel (0) target = $region25
  $region24: #{attention3d_forward.4} parent=0 // pred_region
    _
  $region25: #{attention3d_forward.4} parent=0 // pred_fallthru
    _
  // Predicated region
  $region26: #{attention3d_forward.4} parent=0 // pred_check
    _
  $region27: #{attention3d_forward.4} parent=0 // pred_check_branch
    %30 = sbr.rel (0) target = $region29
  $region28: #{attention3d_forward.4} parent=0 // pred_region
    _
  $region29: #{attention3d_forward.4} parent=0 // pred_fallthru
    _
  // Predicated region
  $region30: #{attention3d_forward.4} parent=0 // pred_check
    _
  $region31: #{attention3d_forward.4} parent=0 // pred_check_branch
    %32 = sbr.rel (0) target = $region33
  $region32: #{attention3d_forward.4} parent=0 // pred_region
    _
  $region33: #{attention3d_forward.4} parent=0 // pred_fallthru
    _
  // Predicated region
  $region34: #{attention3d_forward.4} parent=0 // pred_check
    _
  $region35: #{attention3d_forward.4} parent=0 // pred_check_branch
    %34 = sbr.rel (0) target = $region37
  $region36: #{attention3d_forward.4} parent=0 // pred_region
    _
  $region37: #{attention3d_forward.4} parent=0 // pred_fallthru
    _
  // Predicated region
  $region38: #{attention3d_forward.4} parent=0 // pred_check
    _
  $region39: #{attention3d_forward.4} parent=0 // pred_check_branch
    %36 = sbr.rel (0) target = $region41
  $region40: #{attention3d_forward.4} parent=0 // pred_region
    _
  $region41: #{attention3d_forward.4} parent=0 // pred_fallthru
    _
  // Predicated region
  $region42: #{attention3d_forward.4} parent=0 // pred_check
    _
  $region43: #{attention3d_forward.4} parent=0 // pred_check_branch
    %38 = sbr.rel (0) target = $region45
  $region44: #{attention3d_forward.4} parent=0 // pred_region
    _
  $region45: #{attention3d_forward.4} parent=0 // pred_fallthru
    _
  // Predicated region
  $region46: #{attention3d_forward.4} parent=0 // pred_check
    _
  $region47: #{attention3d_forward.4} parent=0 // pred_check_branch
    %40 = sbr.rel (0) target = $region49
  $region48: #{attention3d_forward.4} parent=0 // pred_region
    _
  $region49: #{attention3d_forward.4} parent=0 // pred_fallthru
    _
  %v41 = vld [vmem:[%s3] sm:$0x1]
  %v42 = vld [vmem:[%s1] sm:$0xff]
  %v43 = vld [vmem:[%s1 + $0x8] sm:$0xff]
  %v45 = vlaneseq
  %v46 = vshrl.u32 %v45, 7
  %v47 = vsub.s32 0, %v46
  %v48 = vrot.slane %v41, %v47
  %v50 = vmul.f32 %v48, %v42
  %v51 = vmul.f32 %v48, %v43
  %v52 = vld [vmem:[%s4] sm:$0x1]
  %v53 = vld [vmem:[%s0] sm:$0xff]
  %v54 = vld [vmem:[%s0 + $0x8] sm:$0xff]
  %v56 = vlaneseq
  %v57 = vshrl.u32 %v56, 7
  %v58 = vsub.s32 0, %v57
  %v59 = vrot.slane %v52, %v58
  %v61 = vmul.f32 %v59, %v53
  %v62 = vmul.f32 %v59, %v54
  %v63 = vadd.f32 %v50, %v61
  %v64 = vadd.f32 %v51, %v62
  %v65 = vld [vmem:[%s5] sm:$0x1]
  %v66 = vld [vmem:[%s2] sm:$0xff]
  %v67 = vld [vmem:[%s2 + $0x8] sm:$0xff]
  %v69 = vlaneseq
  %v70 = vshrl.u32 %v69, 7
  %v71 = vsub.s32 0, %v70
  %v72 = vrot.slane %v65, %v71
  %v74 = vmul.f32 %v72, %v66
  %v75 = vmul.f32 %v72, %v67
  %v76 = vadd.f32 %v63, %v74
  %v77 = vadd.f32 %v64, %v75
  %v78 = vld [vmem:[%s6] sm:$0x1]
  %v80 = vlaneseq
  %v81 = vshrl.u32 %v80, 7
  %v82 = vsub.s32 0, %v81
  %v83 = vrot.slane %v78, %v82
  %v85 = vmul.f32 %v76, %v83
  %v86 = vmul.f32 %v77, %v83
  %v87 = vld [vmem:[%s7] sm:$0x1]
  %v89 = vlaneseq
  %v90 = vshrl.u32 %v89, 7
  %v91 = vsub.s32 0, %v90
  %v92 = vrot.slane %v87, %v91
  %v94 = vadd.f32 %v85, %v92
  %v95 = vadd.f32 %v86, %v92
  %v96 = vmax.f32 %v94, 0.0
  %v97 = vmax.f32 %v95, 0.0
  %v98 = vld [vmem:[%s8] sm:$0xff]
  %v99 = vld [vmem:[%s8 + $0x8] sm:$0xff]
  %v100 = vld [vmem:[%s8 + $0x10] sm:$0xff]
  %v101 = vld [vmem:[%s8 + $0x18] sm:$0xff]
  %v102 = vld [vmem:[%s8 + $0x20] sm:$0xff]
  %v103 = vld [vmem:[%s8 + $0x28] sm:$0xff]
  %v104 = vld [vmem:[%s8 + $0x30] sm:$0xff]
  %v105 = vld [vmem:[%s8 + $0x38] sm:$0xff]
  %v106 = vld [vmem:[%s8 + $0x40] sm:$0xff]
  %v107 = vld [vmem:[%s8 + $0x48] sm:$0xff]
  %v108 = vld [vmem:[%s8 + $0x50] sm:$0xff]
  %v109 = vld [vmem:[%s8 + $0x58] sm:$0xff]
  %v110 = vld [vmem:[%s9] sm:$0x1]
  %v112 = vlaneseq
  %v113 = vshrl.u32 %v112, 7
  %v114 = vsub.s32 0, %v113
  %v115 = vrot.slane %v110, %v114
  %vm117 = vcmask 785408
  %v119 = vsel %vm117, %v96, 0
  %v122 = vsel %vm117, %v97, 0
  %124 = vmatprep.subr.mxu0 0.0
  %125 = vmatpush1.msra.mxu0 %v98
  %126 = vmatprep.subr.mxu0 0.0
  %127 = vmatpush1.msra.mxu0 %v99
  %128 = vmatprep.subr.mxu0 0.0
  %129 = vmatpush1.msra.mxu0 %v100
  %130 = vmatprep.subr.mxu0 0.0
  %131 = vmatpush1.msra.mxu0 %v101
  %132 = vmatprep.subr.mxu0 0.0
  %133 = vmatpush1.msra.mxu0 %v102
  %134 = vmatprep.subr.mxu0 0.0
  %135 = vmatpush1.msra.mxu0 %v103
  %136 = vmatprep.subr.mxu0 0.0
  %137 = vmatpush1.msra.mxu0 %v104
  %138 = vmatprep.subr.mxu0 0.0
  %139 = vmatpush1.msra.mxu0 %v105
  %140 = vmatprep.subr.mxu0 0.0
  %141 = vmatpush1.msra.mxu0 %v106
  %142 = vmatprep.subr.mxu0 0.0
  %143 = vmatpush1.msra.mxu0 %v107
  %144 = vmatprep.subr.mxu0 0.0
  %145 = vmatpush1.msra.mxu0 %v108
  %146 = vmatprep.subr.mxu0 0.0
  %147 = vmatpush1.msra.mxu0 %v109
  %148 = vmatprep.subr.mxu0 0.0
  %149 = vmatpush1.msra.mxu0 0.0
  %150 = vmatprep.subr.mxu0 0.0
  %151 = vmatpush1.msra.mxu0 0.0
  %152 = vmatprep.subr.mxu0 0.0
  %153 = vmatpush1.msra.mxu0 0.0
  %154 = vmatprep.subr.mxu0 0.0
  %155 = vmatpush1.msra.mxu0 0.0
  %156 = vmatprep.subr.mxu0 0.0
  %157 = vmatpush1.msra.mxu0 0.0
  %158 = vmatprep.subr.mxu0 0.0
  %159 = vmatpush1.msra.mxu0 0.0
  %160 = vmatprep.subr.mxu0 0.0
  %161 = vmatpush1.msra.mxu0 0.0
  %162 = vmatprep.subr.mxu0 0.0
  %163 = vmatpush1.msra.mxu0 0.0
  %164 = vmatprep.subr.mxu0 0.0
  %165 = vmatpush1.msra.mxu0 0.0
  %166 = vmatprep.subr.mxu0 0.0
  %167 = vmatpush1.msra.mxu0 0.0
  %168 = vmatprep.subr.mxu0 0.0
  %169 = vmatpush1.msra.mxu0 0.0
  %170 = vmatprep.subr.mxu0 0.0
  %171 = vmatpush1.msra.mxu0 0.0
  %172 = vmatprep.subr.mxu0 0.0
  %173 = vmatpush1.msra.mxu0 0.0
  %174 = vmatprep.subr.mxu0 0.0
  %175 = vmatpush1.msra.mxu0 0.0
  %176 = vmatprep.subr.mxu0 0.0
  %177 = vmatpush1.msra.mxu0 0.0
  %178 = vmatprep.subr.mxu0 0.0
  %179 = vmatpush1.msra.mxu0 0.0
  %180 = vmatprep.subr.mxu0 0.0
  %181 = vmatpush1.msra.mxu0 0.0
  %182 = vmatprep.subr.mxu0 0.0
  %183 = vmatpush1.msra.mxu0 0.0
  %184 = vmatprep.subr.mxu0 0.0
  %185 = vmatpush1.msra.mxu0 0.0
  %186 = vmatprep.subr.mxu0 0.0
  %187 = vmatpush1.msra.mxu0 0.0
  %188 = vmatprep.mubr.f32.mxu0 0.0
  %189 = vmatmul.mubr.f32.gmra.mrb[0].mxu0 %v119
  %v190 = vpop.f32.mrb[0].mxu0
  %v191 = vadd.f32 %v115, %v190
  %v192 = vpop.f32.mrb[0].mxu0
  %193 = vmatprep.mubr.f32.mxu0 0.0
  %194 = vmatmul.mubr.f32.gmra.mrb[0].mxu0 %v122
  %v195 = vpop.f32.mrb[0].mxu0
  %v196 = vadd.f32 %v115, %v195
  %v197 = vpop.f32.mrb[0].mxu0
  %198 = vdwg.mxu0
  %v199 = vmax.f32 %v191, 0.0
  %v200 = vmax.f32 %v196, 0.0
  %v201 = vld [vmem:[%s10] sm:$0x3]
  %v202 = vld [vmem:[%s11] sm:$0x1]
  %v204 = vlaneseq
  %v205 = vshrl.u32 %v204, 7
  %v206 = vsub.s32 0, %v205
  %v207 = vrot.slane %v202, %v206
  %vm209 = vcmask 15360
  %v211 = vsel %vm209, %v199, 0
  %v214 = vsel %vm209, %v200, 0
  %vm216 = vcmask 1041408
  %v218 = vsel %vm216, %v201, 0
  %220 = vmatprep.subr.mxu0 0.0
  %221 = vmatpush1.msra.mxu0 %v218
  %222 = vmatprep.subr.mxu0 0.0
  %223 = vmatpush1.msra.mxu0 0.0
  %224 = vmatprep.subr.mxu0 0.0
  %225 = vmatpush1.msra.mxu0 0.0
  %226 = vmatprep.subr.mxu0 0.0
  %227 = vmatpush1.msra.mxu0 0.0
  %228 = vmatprep.subr.mxu0 0.0
  %229 = vmatpush1.msra.mxu0 0.0
  %230 = vmatprep.subr.mxu0 0.0
  %231 = vmatpush1.msra.mxu0 0.0
  %232 = vmatprep.subr.mxu0 0.0
  %233 = vmatpush1.msra.mxu0 0.0
  %234 = vmatprep.subr.mxu0 0.0
  %235 = vmatpush1.msra.mxu0 0.0
  %236 = vmatprep.subr.mxu0 0.0
  %237 = vmatpush1.msra.mxu0 0.0
  %238 = vmatprep.subr.mxu0 0.0
  %239 = vmatpush1.msra.mxu0 0.0
  %240 = vmatprep.subr.mxu0 0.0
  %241 = vmatpush1.msra.mxu0 0.0
  %242 = vmatprep.subr.mxu0 0.0
  %243 = vmatpush1.msra.mxu0 0.0
  %244 = vmatprep.subr.mxu0 0.0
  %245 = vmatpush1.msra.mxu0 0.0
  %246 = vmatprep.subr.mxu0 0.0
  %247 = vmatpush1.msra.mxu0 0.0
  %248 = vmatprep.subr.mxu0 0.0
  %249 = vmatpush1.msra.mxu0 0.0
  %250 = vmatprep.subr.mxu0 0.0
  %251 = vmatpush1.msra.mxu0 0.0
  %252 = vmatprep.subr.mxu0 0.0
  %253 = vmatpush1.msra.mxu0 0.0
  %254 = vmatprep.subr.mxu0 0.0
  %255 = vmatpush1.msra.mxu0 0.0
  %256 = vmatprep.subr.mxu0 0.0
  %257 = vmatpush1.msra.mxu0 0.0
  %258 = vmatprep.subr.mxu0 0.0
  %259 = vmatpush1.msra.mxu0 0.0
  %260 = vmatprep.subr.mxu0 0.0
  %261 = vmatpush1.msra.mxu0 0.0
  %262 = vmatprep.subr.mxu0 0.0
  %263 = vmatpush1.msra.mxu0 0.0
  %264 = vmatprep.subr.mxu0 0.0
  %265 = vmatpush1.msra.mxu0 0.0
  %266 = vmatprep.subr.mxu0 0.0
  %267 = vmatpush1.msra.mxu0 0.0
  %268 = vmatprep.subr.mxu0 0.0
  %269 = vmatpush1.msra.mxu0 0.0
  %270 = vmatprep.subr.mxu0 0.0
  %271 = vmatpush1.msra.mxu0 0.0
  %272 = vmatprep.subr.mxu0 0.0
  %273 = vmatpush1.msra.mxu0 0.0
  %274 = vmatprep.subr.mxu0 0.0
  %275 = vmatpush1.msra.mxu0 0.0
  %276 = vmatprep.subr.mxu0 0.0
  %277 = vmatpush1.msra.mxu0 0.0
  %278 = vmatprep.subr.mxu0 0.0
  %279 = vmatpush1.msra.mxu0 0.0
  %280 = vmatprep.subr.mxu0 0.0
  %281 = vmatpush1.msra.mxu0 0.0
  %282 = vmatprep.subr.mxu0 0.0
  %283 = vmatpush1.msra.mxu0 0.0
  %284 = vmatprep.mubr.f32.mxu0 0.0
  %285 = vmatmul.mubr.f32.gmra.mrb[0].mxu0 %v211
  %v286 = vpop.f32.mrb[0].mxu0
  %v287 = vadd.f32 %v207, %v286
  %v288 = vpop.f32.mrb[0].mxu0
  %289 = vmatprep.mubr.f32.mxu0 0.0
  %290 = vmatmul.mubr.f32.gmra.mrb[0].mxu0 %v214
  %v291 = vpop.f32.mrb[0].mxu0
  %v292 = vadd.f32 %v207, %v291
  %v293 = vpop.f32.mrb[0].mxu0
  %294 = vdwg.mxu0
  %v295 = vxor.u32 %v287, 2147483648
  %v296 = vxor.u32 %v292, 2147483648
  %v297 = vmul.f32 %v295, 1.442695
  %v298 = vpow.pop %v297
  %v299 = vmul.f32 %v296, 1.442695
  %v300 = vpow.pop %v299
  %v301 = vadd.f32 %v298, 1.0
  %v302 = vadd.f32 %v300, 1.0
  %v303 = vrcp.pop %v301
  %v304 = vmul.f32 1.0, %v303
  %v305 = vrcp.pop %v302
  %v306 = vmul.f32 1.0, %v305
  %307 = vst.msk [vmem:[%s12] sm:$0xff] %vm117, %v304
  %308 = vst.msk [vmem:[%s12 + $0x8] sm:$0xff] %vm117, %v306
  // Predicated region
  $region50: #{attention3d_forward.4} parent=0 // pred_check
    _
  $region51: #{attention3d_forward.4} parent=0 // pred_check_branch
    %310 = sbr.rel (0) target = $region53
  $region52: #{attention3d_forward.4} parent=0 // pred_region
    _
  $region53: #{attention3d_forward.4} parent=0 // pred_fallthru
    _
  // Predicated region
  $region54: #{attention3d_forward.4} parent=0 // pred_check
    _
  $region55: #{attention3d_forward.4} parent=0 // pred_check_branch
    %312 = sbr.rel (0) target = $region57
  $region56: #{attention3d_forward.4} parent=0 // pred_region
    _
  $region57: #{attention3d_forward.4} parent=0 // pred_fallthru
    _

// kernel: attention3d_forward.5
$region0: #{attention3d_forward.5}
  #allocation0 [shape = 'u32[]', space=smem, size = 0x4, offset = 0x4, fixed_abs, tag = 'smem constant byte address 0x4 - core index']
  #allocation1 [shape = 'u32[144,128]{1,0:T(1,128)}', space=vmem, size = 0x12000, scoped, tag = 'internal scratch']
  %s0 = inlined_call_operand.vmem [shape: f32[64,8,128], index: 0, kind: input, shape index: {}]
  %s1 = inlined_call_operand.vmem [shape: f32[64,8], index: 1, kind: input, shape index: {}]
  %s2 = inlined_call_operand.vmem [shape: f32[64,8], index: 2, kind: input, shape index: {}]
  %s3 = inlined_call_operand.vmem [shape: f32[64,16], index: 3, kind: input, shape index: {}]
  %s4 = inlined_call_operand.vmem [shape: f32[8,128], index: 4, kind: input, shape index: {}]
  %s5 = inlined_call_operand.vmem [shape: f32[16,128], index: 5, kind: input, shape index: {}]
  %s6 = inlined_call_operand.vmem [shape: f32[64,8,128], index: 6, kind: output, shape index: {}]
  %s7 = sld [smem:[#allocation0]]
  $region57: #{attention3d_forward.5} parent=0
    _
  %s9 = ssub.s32 1, %s7
  %s10 = scalar_select 0, %s9, %s7
  loop: start=0, step=1, limit=6
  $region2: #{attention3d_forward.5} parent=0 // loop_pre_header
    _
  $region3: #{attention3d_forward.5} parent=0 // loop_header
    %s12 = sphi 0, %s16
    %p13 = scmp.ge.s32.totalorder %s12, 6
    %s22 = sphi 0, %s24
    %s25 = sphi 0, %s22
    %s26 = sphi 0, %s25
    %s42 = sphi 0, %s26
    %s48 = sphi 0, %s50
    %s51 = sphi 0, %s48
    %s52 = sphi 0, %s51
    %s68 = sphi 0, %s52
    %s74 = sphi 0, %s76
    %s77 = sphi 0, %s74
    %s78 = sphi 0, %s77
    %s94 = sphi 0, %s78
    %s100 = sphi 0, %s102
    %s103 = sphi 0, %s100
    %s104 = sphi 0, %s103
    %s120 = sphi 0, %s104
    %s124 = sphi 0, %s124
    %s126 = sphi 0, %s124
    %s127 = sphi 0, %s126
    %s141 = sphi 0, %s127
    %s145 = sphi 0, %s145
    %s147 = sphi 0, %s145
    %s148 = sphi 0, %s147
    %s162 = sphi 0, %s148
    %s168 = sphi 0, %s170
    %s171 = sphi 0, %s168
    %s172 = sphi 0, %s171
    %s188 = sphi 0, %s172
  $region4: #{attention3d_forward.5} parent=0 // loop_header_branch
    %15 = sbr.rel (%p13) target = $region8
  $region5: #{attention3d_forward.5} parent=0 // loop_body
    %s17 = ssub.s32 %s12, 1
    %s18 = ssub.s32 %s12, 2
    %s19 = sadd.s32 %s12, 1
    %s20 = ssub.s32 %s12, %s19
    %p21 = scmp.eq.s32.totalorder %s20, 0
    %s23 = sadd.s32 %s22, 1
    %s24 = scalar_select %p21, %s22, %s23
    %p27 = pneg %p21
    %p28 = scmp.eq.s32.totalorder %s12, 3
    %p29 = por %p27, %p28
    %p30 = scmp.ne.s32.totalorder %s22, %s25
    %p31 = scmp.eq.s32.totalorder %s12, 0
    %p32 = por %p30, %p31
    %p33 = scmp.ne.s32.totalorder %s22, %s25
    %p34 = scmp.eq.s32.totalorder %s17, 3
    %p35 = por %p33, %p34
    %p36 = scmp.ne.s32.totalorder %s25, %s26
    %p37 = scmp.eq.s32.totalorder %s17, 0
    %p38 = por %p36, %p37
    %p39 = scmp.ne.s32.totalorder %s25, %s26
    %p40 = scmp.eq.s32.totalorder %s18, 3
    %p41 = por %p39, %p40
    %p43 = scmp.ne.s32.totalorder %s26, %s42
    %p44 = scmp.eq.s32.totalorder %s18, 0
    %p45 = por %p43, %p44
    %s46 = ssub.s32 %s12, %s19
    %p47 = scmp.eq.s32.totalorder %s46, 0
    %s49 = sadd.s32 %s48, 1
    %s50 = scalar_select %p47, %s48, %s49
    %p53 = pneg %p47
    %p54 = scmp.eq.s32.totalorder %s12, 3
    %p55 = por %p53, %p54
    %p56 = scmp.ne.s32.totalorder %s48, %s51
    %p57 = scmp.eq.s32.totalorder %s12, 0
    %p58 = por %p56, %p57
    %p59 = scmp.ne.s32.totalorder %s48, %s51
    %p60 = scmp.eq.s32.totalorder %s17, 3
    %p61 = por %p59, %p60
    %p62 = scmp.ne.s32.totalorder %s51, %s52
    %p63 = scmp.eq.s32.totalorder %s17, 0
    %p64 = por %p62, %p63
    %p65 = scmp.ne.s32.totalorder %s51, %s52
    %p66 = scmp.eq.s32.totalorder %s18, 3
    %p67 = por %p65, %p66
    %p69 = scmp.ne.s32.totalorder %s52, %s68
    %p70 = scmp.eq.s32.totalorder %s18, 0
    %p71 = por %p69, %p70
    %s72 = ssub.s32 %s12, %s19
    %p73 = scmp.eq.s32.totalorder %s72, 0
    %s75 = sadd.s32 %s74, 1
    %s76 = scalar_select %p73, %s74, %s75
    %p79 = pneg %p73
    %p80 = scmp.eq.s32.totalorder %s12, 3
    %p81 = por %p79, %p80
    %p82 = scmp.ne.s32.totalorder %s74, %s77
    %p83 = scmp.eq.s32.totalorder %s12, 0
    %p84 = por %p82, %p83
    %p85 = scmp.ne.s32.totalorder %s74, %s77
    %p86 = scmp.eq.s32.totalorder %s17, 3
    %p87 = por %p85, %p86
    %p88 = scmp.ne.s32.totalorder %s77, %s78
    %p89 = scmp.eq.s32.totalorder %s17, 0
    %p90 = por %p88, %p89
    %p91 = scmp.ne.s32.totalorder %s77, %s78
    %p92 = scmp.eq.s32.totalorder %s18, 3
    %p93 = por %p91, %p92
    %p95 = scmp.ne.s32.totalorder %s78, %s94
    %p96 = scmp.eq.s32.totalorder %s18, 0
    %p97 = por %p95, %p96
    %s98 = ssub.s32 %s12, %s19
    %p99 = scmp.eq.s32.totalorder %s98, 0
    %s101 = sadd.s32 %s100, 1
    %s102 = scalar_select %p99, %s100, %s101
    %p105 = pneg %p99
    %p106 = scmp.eq.s32.totalorder %s12, 3
    %p107 = por %p105, %p106
    %p108 = scmp.ne.s32.totalorder %s100, %s103
    %p109 = scmp.eq.s32.totalorder %s12, 0
    %p110 = por %p108, %p109
    %p111 = scmp.ne.s32.totalorder %s100, %s103
    %p112 = scmp.eq.s32.totalorder %s17, 3
    %p113 = por %p111, %p112
    %p114 = scmp.ne.s32.totalorder %s103, %s104
    %p115 = scmp.eq.s32.totalorder %s17, 0
    %p116 = por %p114, %p115
    %p117 = scmp.ne.s32.totalorder %s103, %s104
    %p118 = scmp.eq.s32.totalorder %s18, 3
    %p119 = por %p117, %p118
    %p121 = scmp.ne.s32.totalorder %s104, %s120
    %p122 = scmp.eq.s32.totalorder %s18, 0
    %p123 = por %p121, %p122
    %s125 = sadd.s32 %s124, 1
    %p128 = scmp.eq.s32.totalorder %s12, 3
    %p129 = scmp.ne.s32.totalorder %s124, %s126
    %p130 = scmp.eq.s32.totalorder %s12, 0
    %p131 = por %p129, %p130
    %p132 = scmp.ne.s32.totalorder %s124, %s126
    %p133 = scmp.eq.s32.totalorder %s17, 3
    %p134 = por %p132, %p133
    %p135 = scmp.ne.s32.totalorder %s126, %s127
    %p136 = scmp.eq.s32.totalorder %s17, 0
    %p137 = por %p135, %p136
    %p138 = scmp.ne.s32.totalorder %s126, %s127
    %p139 = scmp.eq.s32.totalorder %s18, 3
    %p140 = por %p138, %p139
    %p142 = scmp.ne.s32.totalorder %s127, %s141
    %p143 = scmp.eq.s32.totalorder %s18, 0
    %p144 = por %p142, %p143
    %s146 = sadd.s32 %s145, 1
    %p149 = scmp.eq.s32.totalorder %s12, 3
    %p150 = scmp.ne.s32.totalorder %s145, %s147
    %p151 = scmp.eq.s32.totalorder %s12, 0
    %p152 = por %p150, %p151
    %p153 = scmp.ne.s32.totalorder %s145, %s147
    %p154 = scmp.eq.s32.totalorder %s17, 3
    %p155 = por %p153, %p154
    %p156 = scmp.ne.s32.totalorder %s147, %s148
    %p157 = scmp.eq.s32.totalorder %s17, 0
    %p158 = por %p156, %p157
    %p159 = scmp.ne.s32.totalorder %s147, %s148
    %p160 = scmp.eq.s32.totalorder %s18, 3
    %p161 = por %p159, %p160
    %p163 = scmp.ne.s32.totalorder %s148, %s162
    %p164 = scmp.eq.s32.totalorder %s18, 0
    %p165 = por %p163, %p164
    %s166 = ssub.s32 %s12, %s19
    %p167 = scmp.eq.s32.totalorder %s166, 0
    %s169 = sadd.s32 %s168, 1
    %s170 = scalar_select %p167, %s168, %s169
    %p173 = pneg %p167
    %p174 = scmp.eq.s32.totalorder %s12, 3
    %p175 = por %p173, %p174
    %p176 = scmp.ne.s32.totalorder %s168, %s171
    %p177 = scmp.eq.s32.totalorder %s12, 0
    %p178 = por %p176, %p177
    %p179 = scmp.ne.s32.totalorder %s168, %s171
    %p180 = scmp.eq.s32.totalorder %s17, 3
    %p181 = por %p179, %p180
    %p182 = scmp.ne.s32.totalorder %s171, %s172
    %p183 = scmp.eq.s32.totalorder %s17, 0
    %p184 = por %p182, %p183
    %p185 = scmp.ne.s32.totalorder %s171, %s172
    %p186 = scmp.eq.s32.totalorder %s18, 3
    %p187 = por %p185, %p186
    %p189 = scmp.ne.s32.totalorder %s172, %s188
    %p190 = scmp.eq.s32.totalorder %s18, 0
    %p191 = por %p189, %p190
    %p192 = scmp.le.s32.totalorder 1, %s12
    %p193 = scmp.lt.s32.totalorder %s12, 5
    %p194 = pnand %p192, %p193
    %p195 = pneg %p194
    // Predicated region
    $region9: #{attention3d_forward.5} parent=5 // pred_check
      _
    $region10: #{attention3d_forward.5} parent=5 // pred_check_branch
      %197 = sbr.rel (%p194) target = $region12
    $region11: #{attention3d_forward.5} parent=5 // pred_region
      %s198 = ssub.s32 %s12, 1
      // Predicated region
      $region13: #{attention3d_forward.5} parent=11 // pred_check
        %p199 = pneg %p137
      $region14: #{attention3d_forward.5} parent=11 // pred_check_branch
        %201 = sbr.rel (%p199) target = $region16
      $region15: #{attention3d_forward.5} parent=11 // pred_region
        _
      $region16: #{attention3d_forward.5} parent=11 // pred_fallthru
        _
      // Predicated region
      $region17: #{attention3d_forward.5} parent=11 // pred_check
        %p202 = pneg %p158
      $region18: #{attention3d_forward.5} parent=11 // pred_check_branch
        %204 = sbr.rel (%p202) target = $region20
      $region19: #{attention3d_forward.5} parent=11 // pred_region
        _
      $region20: #{attention3d_forward.5} parent=11 // pred_fallthru
        _
    $region12: #{attention3d_forward.5} parent=5 // pred_fallthru
      _
    %p205 = scmp.lt.s32.totalorder %s12, 4
    // Predicated region
    $region21: #{attention3d_forward.5} parent=5 // pred_check
      %p206 = pneg %p205
    $region22: #{attention3d_forward.5} parent=5 // pred_check_branch
      %208 = sbr.rel (%p206) target = $region24
    $region23: #{attention3d_forward.5} parent=5 // pred_region
      // Predicated region
      $region25: #{attention3d_forward.5} parent=23 // pred_check
        %p209 = pneg %p32
      $region26: #{attention3d_forward.5} parent=23 // pred_check_branch
        %211 = sbr.rel (%p209) target = $region28
      $region27: #{attention3d_forward.5} parent=23 // pred_region
        %s212 = smul.u32 16, %s12
        %p213 = scmp.lt.s32.totalorder %s212, 63
        %s214 = scalar_select %p213, %s212, 63
        %s215 = smul.addr %s214, 8
        %s216 = scalar_lea.vmem %s0, %s215
        %s217 = smul.u32 16, %s12
      $region28: #{attention3d_forward.5} parent=23 // pred_fallthru
        _
      // Predicated region
      $region29: #{attention3d_forward.5} parent=23 // pred_check
        %p218 = pneg %p58
      $region30: #{attention3d_forward.5} parent=23 // pred_check_branch
        %220 = sbr.rel (%p218) target = $region32
      $region31: #{attention3d_forward.5} parent=23 // pred_region
        %s221 = smul.u32 2, %s12
        %p222 = scmp.lt.s32.totalorder %s221, 7
        %s223 = scalar_select %p222, %s221, 7
        %s224 = smul.addr %s223, 8
        %s225 = scalar_lea.vmem %s1, %s224
        %s226 = smul.u32 2, %s12
      $region32: #{attention3d_forward.5} parent=23 // pred_fallthru
        _
      // Predicated region
      $region33: #{attention3d_forward.5} parent=23 // pred_check
        %p227 = pneg %p84
      $region34: #{attention3d_forward.5} parent=23 // pred_check_branch
        %229 = sbr.rel (%p227) target = $region36
      $region35: #{attention3d_forward.5} parent=23 // pred_region
        %s230 = smul.u32 2, %s12
        %p231 = scmp.lt.s32.totalorder %s230, 7
        %s232 = scalar_select %p231, %s230, 7
        %s233 = smul.addr %s232, 8
        %s234 = scalar_lea.vmem %s2, %s233
        %s235 = smul.u32 2, %s12
      $region36: #{attention3d_forward.5} parent=23 // pred_fallthru
        _
      // Predicated region
      $region37: #{attention3d_forward.5} parent=23 // pred_check
        %p236 = pneg %p110
      $region38: #{attention3d_forward.5} parent=23 // pred_check_branch
        %238 = sbr.rel (%p236) target = $region40
      $region39: #{attention3d_forward.5} parent=23 // pred_region
        %s239 = smul.u32 2, %s12
        %p240 = scmp.lt.s32.totalorder %s239, 7
        %s241 = scalar_select %p240, %s239, 7
        %s242 = smul.addr %s241, 8
        %s243 = scalar_lea.vmem %s3, %s242
        %s244 = smul.u32 2, %s12
      $region40: #{attention3d_forward.5} parent=23 // pred_fallthru
        _
    $region24: #{attention3d_forward.5} parent=5 // pred_fallthru
      _
    %p245 = scmp.le.s32.totalorder 1, %s12
    %p246 = scmp.lt.s32.totalorder %s12, 5
    %p247 = pnand %p245, %p246
    %p248 = pneg %p247
    // Predicated region
    $region41: #{attention3d_forward.5} parent=5 // pred_check
      _
    $region42: #{attention3d_forward.5} parent=5 // pred_check_branch
      %250 = sbr.rel (%p247) target = $region44
    $region43: #{attention3d_forward.5} parent=5 // pred_region
      %s251 = ssub.s32 %s12, 1
      %s252 = smul.u32 16, %s17
      %p253 = scmp.lt.s32.totalorder %s252, 63
      %s254 = scalar_select %p253, %s252, 63
      %s255 = smul.addr %s254, 8
      %s256 = scalar_lea.vmem %s0, %s255
      %p257 = pneg %p38
      %p258 = pneg %p35
      %s259 = smul.u32 2, %s17
      %p260 = scmp.lt.s32.totalorder %s259, 7
      %s261 = scalar_select %p260, %s259, 7
      %s262 = smul.addr %s261, 8
      %s263 = scalar_lea.vmem %s1, %s262
      %p264 = pneg %p64
      %p265 = pneg %p61
      %s266 = smul.u32 2, %s17
      %p267 = scmp.lt.s32.totalorder %s266, 7
      %s268 = scalar_select %p267, %s266, 7
      %s269 = smul.addr %s268, 8
      %s270 = scalar_lea.vmem %s2, %s269
      %p271 = pneg %p90
      %p272 = pneg %p87
      %s273 = smul.u32 2, %s17
      %p274 = scmp.lt.s32.totalorder %s273, 7
      %s275 = scalar_select %p274, %s273, 7
      %s276 = smul.addr %s275, 8
      %s277 = scalar_lea.vmem %s3, %s276
      %p278 = pneg %p116
      %p279 = pneg %p113
      %p280 = pneg %p137
      %p281 = pneg %p134
      %p282 = pneg %p158
      %p283 = pneg %p155
      %p284 = pneg %p184
      %p285 = pneg %p181
      %s286 = smul.u32 16, %s17
      %p287 = scmp.lt.s32.totalorder %s286, 63
      %s288 = scalar_select %p287, %s286, 63
      %s289 = smul.addr %s288, 8
      %s290 = scalar_lea.vmem %s6, %s289
      %s291 = smul.u32 16, %s17
      %p292 = scmp.lt.s32.totalorder %s291, 63
      %s293 = scalar_select %p292, %s291, 63
      %s294 = smul.addr %s293, 8
      %s295 = scalar_lea.vmem %s0, %s294
      %s296 = smul.u32 16, %s17
      %s297 = smul.u32 2, %s17
      %p298 = scmp.lt.s32.totalorder %s297, 7
      %s299 = scalar_select %p298, %s297, 7
      %s300 = smul.addr %s299, 8
      %s301 = scalar_lea.vmem %s1, %s300
      %s302 = smul.u32 2, %s17
      %s303 = smul.u32 2, %s17
      %p304 = scmp.lt.s32.totalorder %s303, 7
      %s305 = scalar_select %p304, %s303, 7
      %s306 = smul.addr %s305, 8
      %s307 = scalar_lea.vmem %s2, %s306
      %s308 = smul.u32 2, %s17
      %s309 = smul.u32 2, %s17
      %p310 = scmp.lt.s32.totalorder %s309, 7
      %s311 = scalar_select %p310, %s309, 7
      %s312 = smul.addr %s311, 8
      %s313 = scalar_lea.vmem %s3, %s312
      %s314 = smul.u32 2, %s17
      %s315 = smul.u32 16, %s17
      %p316 = scmp.lt.s32.totalorder %s315, 63
      %s317 = scalar_select %p316, %s315, 63
      %s318 = smul.addr %s317, 8
      %s319 = scalar_lea.vmem %s6, %s318
      %s320 = smul.u32 16, %s17
      %v321 = vld [vmem:[%s307] sm:$0xff]
      %v322 = vld [vmem:[%s307 + $0x8] sm:$0xff]
      %v323 = vld [vmem:[%s4] sm:$0xff]
      %vm324 = vcmask 64512
      %v326 = vsel %vm324, %v321, 0
      %v329 = vsel %vm324, %v322, 0
      %331 = vmatprep.subr.mxu0 0.0
      %332 = vmatpush1.msra.mxu0 %v323
      %333 = vmatprep.subr.mxu0 0.0
      %334 = vmatpush1.msra.mxu0 0.0
      %335 = vmatprep.subr.mxu0 0.0
      %336 = vmatpush1.msra.mxu0 0.0
      %337 = vmatprep.subr.mxu0 0.0
      %338 = vmatpush1.msra.mxu0 0.0
      %339 = vmatprep.subr.mxu0 0.0
      %340 = vmatpush1.msra.mxu0 0.0
      %341 = vmatprep.subr.mxu0 0.0
      %342 = vmatpush1.msra.mxu0 0.0
      %343 = vmatprep.subr.mxu0 0.0
      %344 = vmatpush1.msra.mxu0 0.0
      %345 = vmatprep.subr.mxu0 0.0
      %346 = vmatpush1.msra.mxu0 0.0
      %347 = vmatprep.subr.mxu0 0.0
      %348 = vmatpush1.msra.mxu0 0.0
      %349 = vmatprep.subr.mxu0 0.0
      %350 = vmatpush1.msra.mxu0 0.0
      %351 = vmatprep.subr.mxu0 0.0
      %352 = vmatpush1.msra.mxu0 0.0
      %353 = vmatprep.subr.mxu0 0.0
      %354 = vmatpush1.msra.mxu0 0.0
      %355 = vmatprep.subr.mxu0 0.0
      %356 = vmatpush1.msra.mxu0 0.0
      %357 = vmatprep.subr.mxu0 0.0
      %358 = vmatpush1.msra.mxu0 0.0
      %359 = vmatprep.subr.mxu0 0.0
      %360 = vmatpush1.msra.mxu0 0.0
      %361 = vmatprep.subr.mxu0 0.0
      %362 = vmatpush1.msra.mxu0 0.0
      %363 = vmatprep.subr.mxu0 0.0
      %364 = vmatpush1.msra.mxu0 0.0
      %365 = vmatprep.subr.mxu0 0.0
      %366 = vmatpush1.msra.mxu0 0.0
      %367 = vmatprep.subr.mxu0 0.0
      %368 = vmatpush1.msra.mxu0 0.0
      %369 = vmatprep.subr.mxu0 0.0
      %370 = vmatpush1.msra.mxu0 0.0
      %371 = vmatprep.subr.mxu0 0.0
      %372 = vmatpush1.msra.mxu0 0.0
      %373 = vmatprep.subr.mxu0 0.0
      %374 = vmatpush1.msra.mxu0 0.0
      %375 = vmatprep.subr.mxu0 0.0
      %376 = vmatpush1.msra.mxu0 0.0
      %377 = vmatprep.subr.mxu0 0.0
      %378 = vmatpush1.msra.mxu0 0.0
      %379 = vmatprep.subr.mxu0 0.0
      %380 = vmatpush1.msra.mxu0 0.0
      %381 = vmatprep.subr.mxu0 0.0
      %382 = vmatpush1.msra.mxu0 0.0
      %383 = vmatprep.subr.mxu0 0.0
      %384 = vmatpush1.msra.mxu0 0.0
      %385 = vmatprep.subr.mxu0 0.0
      %386 = vmatpush1.msra.mxu0 0.0
      %387 = vmatprep.subr.mxu0 0.0
      %388 = vmatpush1.msra.mxu0 0.0
      %389 = vmatprep.subr.mxu0 0.0
      %390 = vmatpush1.msra.mxu0 0.0
      %391 = vmatprep.subr.mxu0 0.0
      %392 = vmatpush1.msra.mxu0 0.0
      %393 = vmatprep.subr.mxu0 0.0
      %394 = vmatpush1.msra.mxu0 0.0
      %395 = vmatprep.mubr.f32.mxu0 0.0
      %396 = vmatmul.mubr.f32.gmra.mrb[0].mxu0 %v326
      %v397 = vpop.f32.mrb[0].mxu0
      %v398 = vadd.f32 0.0, %v397
      %v399 = vpop.f32.mrb[0].mxu0
      %400 = vmatprep.mubr.f32.mxu0 0.0
      %401 = vmatmul.mubr.f32.gmra.mrb[0].mxu0 %v329
      %v402 = vpop.f32.mrb[0].mxu0
      %v403 = vadd.f32 0.0, %v402
      %v404 = vpop.f32.mrb[0].mxu0
      %405 = vdwg.mxu0
      %v406 = vld [vmem:[%s313] sm:$0xff]
      %v407 = vld [vmem:[%s313 + $0x8] sm:$0xff]
      %v408 = vld [vmem:[%s5] sm:$0xff]
      %v409 = vld [vmem:[%s5 + $0x8] sm:$0xff]
      %vm410 = vcmask 130048
      %v412 = vsel %vm410, %v406, 0
      %v415 = vsel %vm410, %v407, 0
      %417 = vmatprep.subr.mxu0 0.0
      %418 = vmatpush1.msra.mxu0 %v408
      %419 = vmatprep.subr.mxu0 0.0
      %420 = vmatpush1.msra.mxu0 %v409
      %421 = vmatprep.subr.mxu0 0.0
      %422 = vmatpush1.msra.mxu0 0.0
      %423 = vmatprep.subr.mxu0 0.0
      %424 = vmatpush1.msra.mxu0 0.0
      %425 = vmatprep.subr.mxu0 0.0
      %426 = vmatpush1.msra.mxu0 0.0
      %427 = vmatprep.subr.mxu0 0.0
      %428 = vmatpush1.msra.mxu0 0.0
      %429 = vmatprep.subr.mxu0 0.0
      %430 = vmatpush1.msra.mxu0 0.0
      %431 = vmatprep.subr.mxu0 0.0
      %432 = vmatpush1.msra.mxu0 0.0
      %433 = vmatprep.subr.mxu0 0.0
      %434 = vmatpush1.msra.mxu0 0.0
      %435 = vmatprep.subr.mxu0 0.0
      %436 = vmatpush1.msra.mxu0 0.0
      %437 = vmatprep.subr.mxu0 0.0
      %438 = vmatpush1.msra.mxu0 0.0
      %439 = vmatprep.subr.mxu0 0.0
      %440 = vmatpush1.msra.mxu0 0.0
      %441 = vmatprep.subr.mxu0 0.0
      %442 = vmatpush1.msra.mxu0 0.0
      %443 = vmatprep.subr.mxu0 0.0
      %444 = vmatpush1.msra.mxu0 0.0
      %445 = vmatprep.subr.mxu0 0.0
      %446 = vmatpush1.msra.mxu0 0.0
      %447 = vmatprep.subr.mxu0 0.0
      %448 = vmatpush1.msra.mxu0 0.0
      %449 = vmatprep.subr.mxu0 0.0
      %450 = vmatpush1.msra.mxu0 0.0
      %451 = vmatprep.subr.mxu0 0.0
      %452 = vmatpush1.msra.mxu0 0.0
      %453 = vmatprep.subr.mxu0 0.0
      %454 = vmatpush1.msra.mxu0 0.0
      %455 = vmatprep.subr.mxu0 0.0
      %456 = vmatpush1.msra.mxu0 0.0
      %457 = vmatprep.subr.mxu0 0.0
      %458 = vmatpush1.msra.mxu0 0.0
      %459 = vmatprep.subr.mxu0 0.0
      %460 = vmatpush1.msra.mxu0 0.0
      %461 = vmatprep.subr.mxu0 0.0
      %462 = vmatpush1.msra.mxu0 0.0
      %463 = vmatprep.subr.mxu0 0.0
      %464 = vmatpush1.msra.mxu0 0.0
      %465 = vmatprep.subr.mxu0 0.0
      %466 = vmatpush1.msra.mxu0 0.0
      %467 = vmatprep.subr.mxu0 0.0
      %468 = vmatpush1.msra.mxu0 0.0
      %469 = vmatprep.subr.mxu0 0.0
      %470 = vmatpush1.msra.mxu0 0.0
      %471 = vmatprep.subr.mxu0 0.0
      %472 = vmatpush1.msra.mxu0 0.0
      %473 = vmatprep.subr.mxu0 0.0
      %474 = vmatpush1.msra.mxu0 0.0
      %475 = vmatprep.subr.mxu0 0.0
      %476 = vmatpush1.msra.mxu0 0.0
      %477 = vmatprep.subr.mxu0 0.0
      %478 = vmatpush1.msra.mxu0 0.0
      %479 = vmatprep.subr.mxu0 0.0
      %480 = vmatpush1.msra.mxu0 0.0
      %481 = vmatprep.mubr.f32.mxu0 0.0
      %482 = vmatmul.mubr.f32.gmra.mrb[0].mxu0 %v412
      %v483 = vpop.f32.mrb[0].mxu0
      %v484 = vadd.f32 0.0, %v483
      %v485 = vpop.f32.mrb[0].mxu0
      %486 = vmatprep.mubr.f32.mxu0 0.0
      %487 = vmatmul.mubr.f32.gmra.mrb[0].mxu0 %v415
      %v488 = vpop.f32.mrb[0].mxu0
      %v489 = vadd.f32 0.0, %v488
      %v490 = vpop.f32.mrb[0].mxu0
      %491 = vdwg.mxu0
      %v492 = vmul.f32 %v398, %v484
      %v493 = vmul.f32 %v403, %v489
      %v494 = vld [vmem:[%s301] sm:$0xff]
      %v495 = vld [vmem:[%s301 + $0x8] sm:$0xff]
      %v496 = vld [vmem:[%s295] sm:$0xff]
      %v497 = vld [vmem:[%s295 + $0x8] sm:$0xff]
      %v498 = vld [vmem:[%s295 + $0x10] sm:$0xff]
      %v499 = vld [vmem:[%s295 + $0x18] sm:$0xff]
      %v500 = vld [vmem:[%s295 + $0x20] sm:$0xff]
      %v501 = vld [vmem:[%s295 + $0x28] sm:$0xff]
      %v502 = vld [vmem:[%s295 + $0x30] sm:$0xff]
      %v503 = vld [vmem:[%s295 + $0x38] sm:$0xff]
      %v504 = vld [vmem:[%s295 + $0x40] sm:$0xff]
      %v505 = vld [vmem:[%s295 + $0x48] sm:$0xff]
      %v506 = vld [vmem:[%s295 + $0x50] sm:$0xff]
      %v507 = vld [vmem:[%s295 + $0x58] sm:$0xff]
      %v508 = vld [vmem:[%s295 + $0x60] sm:$0xff]
      %v509 = vld [vmem:[%s295 + $0x68] sm:$0xff]
      %v510 = vld [vmem:[%s295 + $0x70] sm:$0xff]
      %v511 = vld [vmem:[%s295 + $0x78] sm:$0xff]
      %v512 = vlaneseq
      %v513 = vshrl.u32 %v512, 7
      %v514 = vsub.s32 0, %v513
      %v515 = vrot.slane %v494, %v514
      %517 = vbcast.lane.b32.xlu0 %v515, 256
      %v518 = vpop.permute.xlu0 %517
      %v519 = vlaneseq
      %v520 = vshrl.u32 %v519, 7
      %v521 = vsub.s32 1, %v520
      %v522 = vrot.slane %v494, %v521
      %524 = vbcast.lane.b32.xlu0 %v522, 256
      %v525 = vpop.permute.xlu0 %524
      %v526 = vlaneseq
      %v527 = vshrl.u32 %v526, 7
      %v528 = vsub.s32 2, %v527
      %v529 = vrot.slane %v494, %v528
      %531 = vbcast.lane.b32.xlu0 %v529, 256
      %v532 = vpop.permute.xlu0 %531
      %v533 = vlaneseq
      %v534 = vshrl.u32 %v533, 7
      %v535 = vsub.s32 3, %v534
      %v536 = vrot.slane %v494, %v535
      %538 = vbcast.lane.b32.xlu0 %v536, 256
      %v539 = vpop.permute.xlu0 %538
      %v540 = vlaneseq
      %v541 = vshrl.u32 %v540, 7
      %v542 = vsub.s32 4, %v541
      %v543 = vrot.slane %v494, %v542
      %545 = vbcast.lane.b32.xlu0 %v543, 256
      %v546 = vpop.permute.xlu0 %545
      %v547 = vlaneseq
      %v548 = vshrl.u32 %v547, 7
      %v549 = vsub.s32 5, %v548
      %v550 = vrot.slane %v494, %v549
      %552 = vbcast.lane.b32.xlu0 %v550, 256
      %v553 = vpop.permute.xlu0 %552
      %v554 = vlaneseq
      %v555 = vshrl.u32 %v554, 7
      %v556 = vsub.s32 6, %v555
      %v557 = vrot.slane %v494, %v556
      %559 = vbcast.lane.b32.xlu0 %v557, 256
      %v560 = vpop.permute.xlu0 %559
      %v561 = vlaneseq
      %v562 = vshrl.u32 %v561, 7
      %v563 = vsub.s32 7, %v562
      %v564 = vrot.slane %v494, %v563
      %566 = vbcast.lane.b32.xlu0 %v564, 256
      %v567 = vpop.permute.xlu0 %566
      %v568 = vlaneseq
      %v569 = vshrl.u32 %v568, 7
      %v570 = vsub.s32 0, %v569
      %v571 = vrot.slane %v495, %v570
      %573 = vbcast.lane.b32.xlu0 %v571, 256
      %v574 = vpop.permute.xlu0 %573
      %v575 = vlaneseq
      %v576 = vshrl.u32 %v575, 7
      %v577 = vsub.s32 1, %v576
      %v578 = vrot.slane %v495, %v577
      %580 = vbcast.lane.b32.xlu0 %v578, 256
      %v581 = vpop.permute.xlu0 %580
      %v582 = vlaneseq
      %v583 = vshrl.u32 %v582, 7
      %v584 = vsub.s32 2, %v583
      %v585 = vrot.slane %v495, %v584
      %587 = vbcast.lane.b32.xlu0 %v585, 256
      %v588 = vpop.permute.xlu0 %587
      %v589 = vlaneseq
      %v590 = vshrl.u32 %v589, 7
      %v591 = vsub.s32 3, %v590
      %v592 = vrot.slane %v495, %v591
      %594 = vbcast.lane.b32.xlu0 %v592, 256
      %v595 = vpop.permute.xlu0 %594
      %v596 = vlaneseq
      %v597 = vshrl.u32 %v596, 7
      %v598 = vsub.s32 4, %v597
      %v599 = vrot.slane %v495, %v598
      %601 = vbcast.lane.b32.xlu0 %v599, 256
      %v602 = vpop.permute.xlu0 %601
      %v603 = vlaneseq
      %v604 = vshrl.u32 %v603, 7
      %v605 = vsub.s32 5, %v604
      %v606 = vrot.slane %v495, %v605
      %608 = vbcast.lane.b32.xlu0 %v606, 256
      %v609 = vpop.permute.xlu0 %608
      %v610 = vlaneseq
      %v611 = vshrl.u32 %v610, 7
      %v612 = vsub.s32 6, %v611
      %v613 = vrot.slane %v495, %v612
      %615 = vbcast.lane.b32.xlu0 %v613, 256
      %v616 = vpop.permute.xlu0 %615
      %v617 = vlaneseq
      %v618 = vshrl.u32 %v617, 7
      %v619 = vsub.s32 7, %v618
      %v620 = vrot.slane %v495, %v619
      %622 = vbcast.lane.b32.xlu0 %v620, 256
      %v623 = vpop.permute.xlu0 %622
      %v624 = vmul.f32 %v496, %v518
      %v625 = vmul.f32 %v497, %v525
      %v626 = vmul.f32 %v498, %v532
      %v627 = vmul.f32 %v499, %v539
      %v628 = vmul.f32 %v500, %v546
      %v629 = vmul.f32 %v501, %v553
      %v630 = vmul.f32 %v502, %v560
      %v631 = vmul.f32 %v503, %v567
      %v632 = vmul.f32 %v504, %v574
      %v633 = vmul.f32 %v505, %v581
      %v634 = vmul.f32 %v506, %v588
      %v635 = vmul.f32 %v507, %v595
      %v636 = vmul.f32 %v508, %v602
      %v637 = vmul.f32 %v509, %v609
      %v638 = vmul.f32 %v510, %v616
      %v639 = vmul.f32 %v511, %v623
      %v642 = vcombine.high %v492, %v492
      %v644 = vunpack.c.l.s4 1966171168
      %v645 = vunpack.c.0.s8 %v644
      %v646 = vlaneseq
      %v647 = vshrl.u32 %v646, 7
      %v648 = vsub.s32 %v645, %v647
      %v649 = vrot.slane %v492, %v648
      %v651 = vunpack.c.l.s4 1966171168
      %v652 = vunpack.c.0.s8 %v651
      %v653 = vlaneseq
      %v654 = vshrl.u32 %v653, 7
      %v655 = vsub.s32 %v652, %v654
      %v656 = vrot.slane %v642, %v655
      %v657 = vcombine.high %v649, %v649
      %v658 = vcombine.high %v656, %v656
      %v660 = vunpack.c.l.s4 1966171168
      %v661 = vunpack.c.0.s8 %v660
      %v662 = vlaneseq
      %v663 = vshrl.u32 %v662, 7
      %v664 = vsub.s32 %v661, %v663
      %v665 = vrot.slane %v649, %v664
      %v667 = vunpack.c.l.s4 1966171168
      %v668 = vunpack.c.0.s8 %v667
      %v669 = vlaneseq
      %v670 = vshrl.u32 %v669, 7
      %v671 = vsub.s32 %v668, %v670
      %v672 = vrot.slane %v656, %v671
      %v674 = vunpack.c.l.s4 1966171168
      %v675 = vunpack.c.0.s8 %v674
      %v676 = vlaneseq
      %v677 = vshrl.u32 %v676, 7
      %v678 = vsub.s32 %v675, %v677
      %v679 = vrot.slane %v657, %v678
      %v681 = vunpack.c.l.s4 1966171168
      %v682 = vunpack.c.0.s8 %v681
      %v683 = vlaneseq
      %v684 = vshrl.u32 %v683, 7
      %v685 = vsub.s32 %v682, %v684
      %v686 = vrot.slane %v658, %v685
      %v687 = vcombine.high %v665, %v665
      %v688 = vcombine.high %v672, %v672
      %v689 = vcombine.high %v679, %v679
      %v690 = vcombine.high %v686, %v686
      %v691 = vcombine.high %v493, %v493
      %v693 = vunpack.c.l.s4 1966171168
      %v694 = vunpack.c.0.s8 %v693
      %v695 = vlaneseq
      %v696 = vshrl.u32 %v695, 7
      %v697 = vsub.s32 %v694, %v696
      %v698 = vrot.slane %v493, %v697
      %v700 = vunpack.c.l.s4 1966171168
      %v701 = vunpack.c.0.s8 %v700
      %v702 = vlaneseq
      %v703 = vshrl.u32 %v702, 7
      %v704 = vsub.s32 %v701, %v703
      %v705 = vrot.slane %v691, %v704
      %v706 = vcombine.high %v698, %v698
      %v707 = vcombine.high %v705, %v705
      %v709 = vunpack.c.l.s4 1966171168
      %v710 = vunpack.c.0.s8 %v709
      %v711 = vlaneseq
      %v712 = vshrl.u32 %v711, 7
      %v713 = vsub.s32 %v710, %v712
      %v714 = vrot.slane %v698, %v713
      %v716 = vunpack.c.l.s4 1966171168
      %v717 = vunpack.c.0.s8 %v716
      %v718 = vlaneseq
      %v719 = vshrl.u32 %v718, 7
      %v720 = vsub.s32 %v717, %v719
      %v721 = vrot.slane %v705, %v720
      %v723 = vunpack.c.l.s4 1966171168
      %v724 = vunpack.c.0.s8 %v723
      %v725 = vlaneseq
      %v726 = vshrl.u32 %v725, 7
      %v727 = vsub.s32 %v724, %v726
      %v728 = vrot.slane %v706, %v727
      %v730 = vunpack.c.l.s4 1966171168
      %v731 = vunpack.c.0.s8 %v730
      %v732 = vlaneseq
      %v733 = vshrl.u32 %v732, 7
      %v734 = vsub.s32 %v731, %v733
      %v735 = vrot.slane %v707, %v734
      %v736 = vcombine.high %v714, %v714
      %v737 = vcombine.high %v721, %v721
      %v738 = vcombine.high %v728, %v728
      %v739 = vcombine.high %v735, %v735
      %v740 = vlaneseq
      %v741 = vshrl.u32 %v740, 7
      %v742 = vsub.s32 0, %v741
      %v743 = vrot.slane %v665, %v742
      %v744 = vlaneseq
      %v745 = vshrl.u32 %v744, 7
      %v746 = vsub.s32 0, %v745
      %v747 = vrot.slane %v679, %v746
      %v748 = vlaneseq
      %v749 = vshrl.u32 %v748, 7
      %v750 = vsub.s32 0, %v749
      %v751 = vrot.slane %v687, %v750
      %v752 = vlaneseq
      %v753 = vshrl.u32 %v752, 7
      %v754 = vsub.s32 0, %v753
      %v755 = vrot.slane %v689, %v754
      %v756 = vlaneseq
      %v757 = vshrl.u32 %v756, 7
      %v758 = vsub.s32 0, %v757
      %v759 = vrot.slane %v672, %v758
      %v760 = vlaneseq
      %v761 = vshrl.u32 %v760, 7
      %v762 = vsub.s32 0, %v761
      %v763 = vrot.slane %v686, %v762
      %v764 = vlaneseq
      %v765 = vshrl.u32 %v764, 7
      %v766 = vsub.s32 0, %v765
      %v767 = vrot.slane %v688, %v766
      %v768 = vlaneseq
      %v769 = vshrl.u32 %v768, 7
      %v770 = vsub.s32 0, %v769
      %v771 = vrot.slane %v690, %v770
      %v772 = vlaneseq
      %v773 = vshrl.u32 %v772, 7
      %v774 = vsub.s32 0, %v773
      %v775 = vrot.slane %v714, %v774
      %v776 = vlaneseq
      %v777 = vshrl.u32 %v776, 7
      %v778 = vsub.s32 0, %v777
      %v779 = vrot.slane %v728, %v778
      %v780 = vlaneseq
      %v781 = vshrl.u32 %v780, 7
      %v782 = vsub.s32 0, %v781
      %v783 = vrot.slane %v736, %v782
      %v784 = vlaneseq
      %v785 = vshrl.u32 %v784, 7
      %v786 = vsub.s32 0, %v785
      %v787 = vrot.slane %v738, %v786
      %v788 = vlaneseq
      %v789 = vshrl.u32 %v788, 7
      %v790 = vsub.s32 0, %v789
      %v791 = vrot.slane %v721, %v790
      %v792 = vlaneseq
      %v793 = vshrl.u32 %v792, 7
      %v794 = vsub.s32 0, %v793
      %v795 = vrot.slane %v735, %v794
      %v796 = vlaneseq
      %v797 = vshrl.u32 %v796, 7
      %v798 = vsub.s32 0, %v797
      %v799 = vrot.slane %v737, %v798
      %v800 = vlaneseq
      %v801 = vshrl.u32 %v800, 7
      %v802 = vsub.s32 0, %v801
      %v803 = vrot.slane %v739, %v802
      %v820 = vmul.f32 %v624, %v743
      %v821 = vmul.f32 %v625, %v747
      %v822 = vmul.f32 %v626, %v751
      %v823 = vmul.f32 %v627, %v755
      %v824 = vmul.f32 %v628, %v759
      %v825 = vmul.f32 %v629, %v763
      %v826 = vmul.f32 %v630, %v767
      %v827 = vmul.f32 %v631, %v771
      %v828 = vmul.f32 %v632, %v775
      %v829 = vmul.f32 %v633, %v779
      %v830 = vmul.f32 %v634, %v783
      %v831 = vmul.f32 %v635, %v787
      %v832 = vmul.f32 %v636, %v791
      %v833 = vmul.f32 %v637, %v795
      %v834 = vmul.f32 %v638, %v799
      %v835 = vmul.f32 %v639, %v803
      %836 = vst [vmem:[%s319] sm:$0xff] %v820
      %837 = vst [vmem:[%s319 + $0x8] sm:$0xff] %v821
      %838 = vst [vmem:[%s319 + $0x10] sm:$0xff] %v822
      %839 = vst [vmem:[%s319 + $0x18] sm:$0xff] %v823
      %840 = vst [vmem:[%s319 + $0x20] sm:$0xff] %v824
      %841 = vst [vmem:[%s319 + $0x28] sm:$0xff] %v825
      %842 = vst [vmem:[%s319 + $0x30] sm:$0xff] %v826
      %843 = vst [vmem:[%s319 + $0x38] sm:$0xff] %v827
      %844 = vst [vmem:[%s319 + $0x40] sm:$0xff] %v828
      %845 = vst [vmem:[%s319 + $0x48] sm:$0xff] %v829
      %846 = vst [vmem:[%s319 + $0x50] sm:$0xff] %v830
      %847 = vst [vmem:[%s319 + $0x58] sm:$0xff] %v831
      %848 = vst [vmem:[%s319 + $0x60] sm:$0xff] %v832
      %849 = vst [vmem:[%s319 + $0x68] sm:$0xff] %v833
      %850 = vst [vmem:[%s319 + $0x70] sm:$0xff] %v834
      %851 = vst [vmem:[%s319 + $0x78] sm:$0xff] %v835
      %s852 = smul.u32 16, %s17
      %p853 = scmp.lt.s32.totalorder %s852, 63
      %s854 = scalar_select %p853, %s852, 63
      %s855 = smul.addr %s854, 8
      %s856 = scalar_lea.vmem %s6, %s855
      // Predicated region
      $region45: #{attention3d_forward.5} parent=43 // pred_check
        %p857 = pneg %p181
      $region46: #{attention3d_forward.5} parent=43 // pred_check_branch
        %859 = sbr.rel (%p857) target = $region48
      $region47: #{attention3d_forward.5} parent=43 // pred_region
        %s860 = smul.u32 16, %s17
      $region48: #{attention3d_forward.5} parent=43 // pred_fallthru
        _
    $region44: #{attention3d_forward.5} parent=5 // pred_fallthru
      _
    %p861 = scmp.le.s32.totalorder 2, %s12
    // Predicated region
    $region49: #{attention3d_forward.5} parent=5 // pred_check
      %p862 = pneg %p861
    $region50: #{attention3d_forward.5} parent=5 // pred_check_branch
      %864 = sbr.rel (%p862) target = $region52
    $region51: #{attention3d_forward.5} parent=5 // pred_region
      %s865 = ssub.s32 %s12, 2
      // Predicated region
      $region53: #{attention3d_forward.5} parent=51 // pred_check
        %p866 = pneg %p187
      $region54: #{attention3d_forward.5} parent=51 // pred_check_branch
        %868 = sbr.rel (%p866) target = $region56
      $region55: #{attention3d_forward.5} parent=51 // pred_region
        %s869 = smul.u32 16, %s18
        %p870 = scmp.lt.s32.totalorder %s869, 63
        %s871 = scalar_select %p870, %s869, 63
        %s872 = smul.addr %s871, 8
        %s873 = scalar_lea.vmem %s6, %s872
      $region56: #{attention3d_forward.5} parent=51 // pred_fallthru
        _
    $region52: #{attention3d_forward.5} parent=5 // pred_fallthru
      _
  $region6: #{attention3d_forward.5} parent=0 // loop_footer
    %s16 = sadd.s32 1, %s12
  $region7: #{attention3d_forward.5} parent=0 // loop_footer_branch
    %11 = sbr.rel target = $region3
  $region8: #{attention3d_forward.5} parent=0 // loop_exit
    _

</llo_original>
